<compile_context>
chip_gen: v7x
topology: tpu7x:2x2x1
jax: 0.10.0
libtpu: 0.0.40
codegen_flags: <defaults>
</compile_context>

<pallas_src>
import math
from functools import partial

import numpy as np
import jax
import jax.numpy as jnp
from jax import lax
from jax.experimental import pallas as pl
from jax.experimental.pallas import tpu as pltpu


def mha_kernel(x_ref, w_in_ref, b_in_ref, wo_ref, bo_ref, bias_ref, rsel_ref,
               o_ref, aw_ref, *, num_heads):
    """Full multi-head self-attention forward for the whole (folded) batch.

    x_ref   : (L*N, E)     tokens, rows ordered (l, n)  [= (L, N, E) flattened]
    w_in_ref: (E, 3*E)     [Wq^T * scale | Wk^T | Wv^T]
    b_in_ref: (1, 3*E)     [bq * scale | bk | bv]
    wo_ref  : (E, E)       Wo^T
    bo_ref  : (1, E)       out-proj bias
    bias_ref: (L*N, L*N)   additive mask: 0 for same-batch, -1e30 cross-batch
    rsel_ref: (N, L, L*N)  one-hot selectors, rsel[n, a, a*N + n] = 1
    o_ref   : (L*N, E)     attention output (rows ordered (l, n))
    aw_ref  : (N, L, L)    head-averaged attention weights
    """
    H = num_heads
    LN, E = x_ref.shape
    hd = E // H
    N, L, _ = rsel_ref.shape

    x = x_ref[...]
    # Fused QKV projection: a single MXU matmul for all heads / q / k / v.
    qkv = jnp.dot(x, w_in_ref[...],
                  preferred_element_type=jnp.float32) + b_in_ref[...]

    bias = bias_ref[...]                       # blocks out cross-batch scores

    o_heads = []
    p_sum = jnp.zeros((LN, LN), jnp.float32)
    for h in range(H):                         # static unroll, H is small
        q_h = qkv[:, h * hd:(h + 1) * hd]                    # (LN, hd)
        k_h = qkv[:, E + h * hd:E + (h + 1) * hd]            # (LN, hd)
        v_h = qkv[:, 2 * E + h * hd:2 * E + (h + 1) * hd]    # (LN, hd)

        # Scores over all (query, key) row pairs; cross-batch pairs masked.
        s_h = lax.dot_general(q_h, k_h, (((1,), (1,)), ((), ())),
                              preferred_element_type=jnp.float32) + bias
        s_h = s_h - jnp.max(s_h, axis=-1, keepdims=True)
        e_h = jnp.exp(s_h)
        p_h = e_h * pl.reciprocal(jnp.sum(e_h, axis=-1, keepdims=True),
                                  approx=False)
        # TODO(synk): training-mode dropout on p_h would go here (eval: no-op).
        p_sum = p_sum + p_h
        o_heads.append(jnp.dot(p_h, v_h, preferred_element_type=jnp.float32))

    # Heads back-to-back in lanes, then a single output-projection matmul.
    o_cat = jnp.concatenate(o_heads, axis=-1)                # (LN, E)
    out = jnp.dot(o_cat, wo_ref[...],
                  preferred_element_type=jnp.float32) + bo_ref[...]
    o_ref[...] = out.astype(o_ref.dtype)

    # Head-averaged attention weights, compacted to (N, L, L) with two small
    # selection matmuls (per-batch row/col gather expressed as one-hot GEMMs).
    p_mean = p_sum * jnp.float32(1.0 / H)
    rsel = rsel_ref[...]                                     # (N, L, LN)
    tmp = jnp.dot(rsel.reshape(LN, LN), p_mean,
                  preferred_element_type=jnp.float32)        # rows (n, a)
    aw = jnp.einsum('nac,nbc->nab', tmp.reshape(N, L, LN), rsel,
                    preferred_element_type=jnp.float32)      # (N, L, L)
    aw_ref[...] = aw.astype(aw_ref.dtype)


def prepare_mha_params(params, num_heads, seq_len, batch):
    """One-time weight prep + constant tables (hoisted out of the per-call path)."""
    E = params["wq"].shape[0]
    hd = E // num_heads
    scale = 1.0 / math.sqrt(hd)

    w_in = jnp.concatenate(
        [params["wq"].T * scale, params["wk"].T, params["wv"].T], axis=1)  # (E, 3E)
    b_in = jnp.concatenate(
        [params["bq"] * scale, params["bk"], params["bv"]]).reshape(1, 3 * E)
    wo_t = params["wo"].T                                                  # (E, E)
    bo = params["bo"].reshape(1, E)

    L, N = seq_len, batch
    LN = L * N
    idx = np.arange(LN)
    same_batch = (idx[:, None] % N) == (idx[None, :] % N)
    bias = jnp.asarray(np.where(same_batch, 0.0, -1e30).astype(np.float32))

    rsel_np = np.zeros((N, L, LN), np.float32)
    for n in range(N):
        for a in range(L):
            rsel_np[n, a, a * N + n] = 1.0
    rsel = jnp.asarray(rsel_np)

    return {"w_in": w_in, "b_in": b_in, "wo_t": wo_t, "bo": bo,
            "bias": bias, "rsel": rsel}


@partial(jax.jit, static_argnames=("num_heads",))
def multihead_self_attention(x_lne, prep, num_heads):
    """x_lne: (L, N, E) like PyTorch. Returns (attn_out (L,N,E), attn_w (N,L,L))."""
    L, N, E = x_lne.shape
    x2d = x_lne.reshape(L * N, E)      # free: (L, N, E) is row-major contiguous

    vmem = pl.BlockSpec(memory_space=pltpu.MemorySpace.VMEM)
    out2d, aw = pl.pallas_call(
        partial(mha_kernel, num_heads=num_heads),
        out_shape=(jax.ShapeDtypeStruct((L * N, E), jnp.float32),
                   jax.ShapeDtypeStruct((N, L, L), jnp.float32)),
        in_specs=[vmem] * 7,
        out_specs=(vmem, vmem),
    )(x2d, prep["w_in"], prep["b_in"], prep["wo_t"], prep["bo"],
      prep["bias"], prep["rsel"])

    return out2d.reshape(L, N, E), aw   # free reshape back to PyTorch layout


def reference_mha(x_lne, params, num_heads):
    """Plain-JAX reference mirroring torch.nn.MultiheadAttention (eval)."""
    L, N, E = x_lne.shape
    hd = E // num_heads
    scale = 1.0 / math.sqrt(hd)
    x = jnp.transpose(x_lne, (1, 0, 2))                       # (N, L, E)
    q = x @ params["wq"].T + params["bq"]
    k = x @ params["wk"].T + params["bk"]
    v = x @ params["wv"].T + params["bv"]

    def split(t):  # (N, L, E) -> (N, H, L, hd)
        return jnp.transpose(t.reshape(N, L, num_heads, hd), (0, 2, 1, 3))

    qh, kh, vh = split(q) * scale, split(k), split(v)
    s = jnp.einsum("nhld,nhsd->nhls", qh, kh)
    p = jax.nn.softmax(s, axis=-1)
    o = jnp.einsum("nhls,nhsd->nhld", p, vh)
    o = jnp.transpose(o, (0, 2, 1, 3)).reshape(N, L, E)
    o = o @ params["wo"].T + params["bo"]
    return jnp.transpose(o, (1, 0, 2)), jnp.mean(p, axis=1)


if __name__ == "__main__":
    # Module config: embed_dim=32, num_heads=4, dropout=0.0 (eval -> no-op)
    embed_dim, num_heads = 32, 4
    L, N = 8, 2   # seq length, batch

    key = jax.random.PRNGKey(0)
    kx, kw, kb, kwo, kbo = jax.random.split(key, 5)

    # Deterministic synthetic parameters; shapes match nn.MultiheadAttention.
    in_proj_weight = jax.random.normal(kw, (3 * embed_dim, embed_dim), jnp.float32) * 0.1
    in_proj_bias = jax.random.normal(kb, (3 * embed_dim,), jnp.float32) * 0.1
    out_proj_weight = jax.random.normal(kwo, (embed_dim, embed_dim), jnp.float32) * 0.1
    out_proj_bias = jax.random.normal(kbo, (embed_dim,), jnp.float32) * 0.1

    params = {
        "wq": in_proj_weight[0 * embed_dim:1 * embed_dim],
        "wk": in_proj_weight[1 * embed_dim:2 * embed_dim],
        "wv": in_proj_weight[2 * embed_dim:3 * embed_dim],
        "bq": in_proj_bias[0 * embed_dim:1 * embed_dim],
        "bk": in_proj_bias[1 * embed_dim:2 * embed_dim],
        "bv": in_proj_bias[2 * embed_dim:3 * embed_dim],
        "wo": out_proj_weight,
        "bo": out_proj_bias,
    }

    # PyTorch MultiheadAttention input convention: (L, N, E)
    x = jax.random.normal(kx, (L, N, embed_dim), jnp.float32)

    # One-time prep (fused weights + constant mask / selector tables).
    prep = prepare_mha_params(params, num_heads, seq_len=L, batch=N)

    attn_out, attn_w = multihead_self_attention(x, prep, num_heads)
    attn_out, attn_w = jax.block_until_ready((attn_out, attn_w))

    ref_out, ref_w = reference_mha(x, params, num_heads)
    assert attn_out.shape == (L, N, embed_dim)
    assert attn_w.shape == (N, L, L)
    assert jnp.allclose(attn_out, ref_out, atol=1e-5, rtol=1e-4)
    assert jnp.allclose(attn_w, ref_w, atol=1e-5, rtol=1e-4)

    print("KERNEL_OK")
</pallas_src>

<mosaic_0001>
module attributes {stable_mosaic.version = 11 : i64} {
  func.func @mha_kernel(%arg0: memref<16x32xf32, #tpu.memory_space<vmem>>, %arg1: memref<32x96xf32, #tpu.memory_space<vmem>>, %arg2: memref<1x96xf32, #tpu.memory_space<vmem>>, %arg3: memref<32x32xf32, #tpu.memory_space<vmem>>, %arg4: memref<1x32xf32, #tpu.memory_space<vmem>>, %arg5: memref<16x16xf32, #tpu.memory_space<vmem>>, %arg6: memref<2x8x16xf32, #tpu.memory_space<vmem>>, %arg7: memref<16x32xf32, #tpu.memory_space<vmem>>, %arg8: memref<2x8x8xf32, #tpu.memory_space<vmem>>) attributes {dimension_semantics = [], scalar_prefetch = 0 : i64, scratch_operands = 0 : i64, tpu.core_type = #tpu.core_type<tc>} {
    %c0 = arith.constant 0 : index
    %c0_0 = arith.constant 0 : index
    %0 = vector.load %arg0[%c0, %c0_0] : memref<16x32xf32, #tpu.memory_space<vmem>>, vector<16x32xf32>
    %c0_1 = arith.constant 0 : index
    %c0_2 = arith.constant 0 : index
    %1 = vector.load %arg1[%c0_1, %c0_2] : memref<32x96xf32, #tpu.memory_space<vmem>>, vector<32x96xf32>
    %cst = arith.constant dense<0.000000e+00> : vector<16x96xf32>
    %2 = tpu.matmul %0, %1, %cst {dimension_numbers = #tpu.dot_dimension_numbers<[1], [0], [0], [1], [0, 0, 1, 1], [], []>} : vector<16x32xf32>, vector<32x96xf32>, vector<16x96xf32> -> vector<16x96xf32>
    %c0_3 = arith.constant 0 : index
    %c0_4 = arith.constant 0 : index
    %3 = vector.load %arg2[%c0_3, %c0_4] : memref<1x96xf32, #tpu.memory_space<vmem>>, vector<1x96xf32>
    %4 = vector.broadcast %3 : vector<1x96xf32> to vector<16x96xf32>
    %5 = arith.addf %2, %4 : vector<16x96xf32>
    %c0_5 = arith.constant 0 : index
    %c0_6 = arith.constant 0 : index
    %6 = vector.load %arg5[%c0_5, %c0_6] : memref<16x16xf32, #tpu.memory_space<vmem>>, vector<16x16xf32>
    %cst_7 = arith.constant 0.000000e+00 : f32
    %7 = vector.broadcast %cst_7 : f32 to vector<16x16xf32>
    %8 = vector.extract_strided_slice %5 {offsets = [0, 0], sizes = [16, 8], strides = [1, 1]} : vector<16x96xf32> to vector<16x8xf32>
    %9 = vector.extract_strided_slice %5 {offsets = [0, 32], sizes = [16, 8], strides = [1, 1]} : vector<16x96xf32> to vector<16x8xf32>
    %10 = vector.extract_strided_slice %5 {offsets = [0, 64], sizes = [16, 8], strides = [1, 1]} : vector<16x96xf32> to vector<16x8xf32>
    %cst_8 = arith.constant dense<0.000000e+00> : vector<16x16xf32>
    %11 = tpu.matmul %8, %9, %cst_8 {dimension_numbers = #tpu.dot_dimension_numbers<[1], [1], [0], [0], [0, 0, 1, 0], [], []>} : vector<16x8xf32>, vector<16x8xf32>, vector<16x16xf32> -> vector<16x16xf32>
    %12 = arith.addf %11, %6 : vector<16x16xf32>
    %cst_9 = arith.constant dense<0xFF800000> : vector<16xf32>
    %13 = vector.multi_reduction <maximumf>, %12, %cst_9 [1] : vector<16x16xf32> to vector<16xf32>
    %14 = vector.shape_cast %13 : vector<16xf32> to vector<16x1xf32>
    %15 = vector.broadcast %14 : vector<16x1xf32> to vector<16x16xf32>
    %16 = arith.subf %12, %15 : vector<16x16xf32>
    %17 = math.exp %16 : vector<16x16xf32>
    %cst_10 = arith.constant dense<0.000000e+00> : vector<16xf32>
    %18 = vector.multi_reduction <add>, %17, %cst_10 [1] : vector<16x16xf32> to vector<16xf32>
    %19 = vector.shape_cast %18 : vector<16xf32> to vector<16x1xf32>
    %20 = tpu.reciprocal %19 : vector<16x1xf32> -> vector<16x1xf32>
    %21 = vector.broadcast %20 : vector<16x1xf32> to vector<16x16xf32>
    %22 = arith.mulf %17, %21 : vector<16x16xf32>
    %23 = arith.addf %7, %22 : vector<16x16xf32>
    %cst_11 = arith.constant dense<0.000000e+00> : vector<16x8xf32>
    %24 = tpu.matmul %22, %10, %cst_11 {dimension_numbers = #tpu.dot_dimension_numbers<[1], [0], [0], [1], [0, 0, 1, 1], [], []>} : vector<16x16xf32>, vector<16x8xf32>, vector<16x8xf32> -> vector<16x8xf32>
    %25 = vector.extract_strided_slice %5 {offsets = [0, 8], sizes = [16, 8], strides = [1, 1]} : vector<16x96xf32> to vector<16x8xf32>
    %26 = vector.extract_strided_slice %5 {offsets = [0, 40], sizes = [16, 8], strides = [1, 1]} : vector<16x96xf32> to vector<16x8xf32>
    %27 = vector.extract_strided_slice %5 {offsets = [0, 72], sizes = [16, 8], strides = [1, 1]} : vector<16x96xf32> to vector<16x8xf32>
    %cst_12 = arith.constant dense<0.000000e+00> : vector<16x16xf32>
    %28 = tpu.matmul %25, %26, %cst_12 {dimension_numbers = #tpu.dot_dimension_numbers<[1], [1], [0], [0], [0, 0, 1, 0], [], []>} : vector<16x8xf32>, vector<16x8xf32>, vector<16x16xf32> -> vector<16x16xf32>
    %29 = arith.addf %28, %6 : vector<16x16xf32>
    %cst_13 = arith.constant dense<0xFF800000> : vector<16xf32>
    %30 = vector.multi_reduction <maximumf>, %29, %cst_13 [1] : vector<16x16xf32> to vector<16xf32>
    %31 = vector.shape_cast %30 : vector<16xf32> to vector<16x1xf32>
    %32 = vector.broadcast %31 : vector<16x1xf32> to vector<16x16xf32>
    %33 = arith.subf %29, %32 : vector<16x16xf32>
    %34 = math.exp %33 : vector<16x16xf32>
    %cst_14 = arith.constant dense<0.000000e+00> : vector<16xf32>
    %35 = vector.multi_reduction <add>, %34, %cst_14 [1] : vector<16x16xf32> to vector<16xf32>
    %36 = vector.shape_cast %35 : vector<16xf32> to vector<16x1xf32>
    %37 = tpu.reciprocal %36 : vector<16x1xf32> -> vector<16x1xf32>
    %38 = vector.broadcast %37 : vector<16x1xf32> to vector<16x16xf32>
    %39 = arith.mulf %34, %38 : vector<16x16xf32>
    %40 = arith.addf %23, %39 : vector<16x16xf32>
    %cst_15 = arith.constant dense<0.000000e+00> : vector<16x8xf32>
    %41 = tpu.matmul %39, %27, %cst_15 {dimension_numbers = #tpu.dot_dimension_numbers<[1], [0], [0], [1], [0, 0, 1, 1], [], []>} : vector<16x16xf32>, vector<16x8xf32>, vector<16x8xf32> -> vector<16x8xf32>
    %42 = vector.extract_strided_slice %5 {offsets = [0, 16], sizes = [16, 8], strides = [1, 1]} : vector<16x96xf32> to vector<16x8xf32>
    %43 = vector.extract_strided_slice %5 {offsets = [0, 48], sizes = [16, 8], strides = [1, 1]} : vector<16x96xf32> to vector<16x8xf32>
    %44 = vector.extract_strided_slice %5 {offsets = [0, 80], sizes = [16, 8], strides = [1, 1]} : vector<16x96xf32> to vector<16x8xf32>
    %cst_16 = arith.constant dense<0.000000e+00> : vector<16x16xf32>
    %45 = tpu.matmul %42, %43, %cst_16 {dimension_numbers = #tpu.dot_dimension_numbers<[1], [1], [0], [0], [0, 0, 1, 0], [], []>} : vector<16x8xf32>, vector<16x8xf32>, vector<16x16xf32> -> vector<16x16xf32>
    %46 = arith.addf %45, %6 : vector<16x16xf32>
    %cst_17 = arith.constant dense<0xFF800000> : vector<16xf32>
    %47 = vector.multi_reduction <maximumf>, %46, %cst_17 [1] : vector<16x16xf32> to vector<16xf32>
    %48 = vector.shape_cast %47 : vector<16xf32> to vector<16x1xf32>
    %49 = vector.broadcast %48 : vector<16x1xf32> to vector<16x16xf32>
    %50 = arith.subf %46, %49 : vector<16x16xf32>
    %51 = math.exp %50 : vector<16x16xf32>
    %cst_18 = arith.constant dense<0.000000e+00> : vector<16xf32>
    %52 = vector.multi_reduction <add>, %51, %cst_18 [1] : vector<16x16xf32> to vector<16xf32>
    %53 = vector.shape_cast %52 : vector<16xf32> to vector<16x1xf32>
    %54 = tpu.reciprocal %53 : vector<16x1xf32> -> vector<16x1xf32>
    %55 = vector.broadcast %54 : vector<16x1xf32> to vector<16x16xf32>
    %56 = arith.mulf %51, %55 : vector<16x16xf32>
    %57 = arith.addf %40, %56 : vector<16x16xf32>
    %cst_19 = arith.constant dense<0.000000e+00> : vector<16x8xf32>
    %58 = tpu.matmul %56, %44, %cst_19 {dimension_numbers = #tpu.dot_dimension_numbers<[1], [0], [0], [1], [0, 0, 1, 1], [], []>} : vector<16x16xf32>, vector<16x8xf32>, vector<16x8xf32> -> vector<16x8xf32>
    %59 = vector.extract_strided_slice %5 {offsets = [0, 24], sizes = [16, 8], strides = [1, 1]} : vector<16x96xf32> to vector<16x8xf32>
    %60 = vector.extract_strided_slice %5 {offsets = [0, 56], sizes = [16, 8], strides = [1, 1]} : vector<16x96xf32> to vector<16x8xf32>
    %61 = vector.extract_strided_slice %5 {offsets = [0, 88], sizes = [16, 8], strides = [1, 1]} : vector<16x96xf32> to vector<16x8xf32>
    %cst_20 = arith.constant dense<0.000000e+00> : vector<16x16xf32>
    %62 = tpu.matmul %59, %60, %cst_20 {dimension_numbers = #tpu.dot_dimension_numbers<[1], [1], [0], [0], [0, 0, 1, 0], [], []>} : vector<16x8xf32>, vector<16x8xf32>, vector<16x16xf32> -> vector<16x16xf32>
    %63 = arith.addf %62, %6 : vector<16x16xf32>
    %cst_21 = arith.constant dense<0xFF800000> : vector<16xf32>
    %64 = vector.multi_reduction <maximumf>, %63, %cst_21 [1] : vector<16x16xf32> to vector<16xf32>
    %65 = vector.shape_cast %64 : vector<16xf32> to vector<16x1xf32>
    %66 = vector.broadcast %65 : vector<16x1xf32> to vector<16x16xf32>
    %67 = arith.subf %63, %66 : vector<16x16xf32>
    %68 = math.exp %67 : vector<16x16xf32>
    %cst_22 = arith.constant dense<0.000000e+00> : vector<16xf32>
    %69 = vector.multi_reduction <add>, %68, %cst_22 [1] : vector<16x16xf32> to vector<16xf32>
    %70 = vector.shape_cast %69 : vector<16xf32> to vector<16x1xf32>
    %71 = tpu.reciprocal %70 : vector<16x1xf32> -> vector<16x1xf32>
    %72 = vector.broadcast %71 : vector<16x1xf32> to vector<16x16xf32>
    %73 = arith.mulf %68, %72 : vector<16x16xf32>
    %74 = arith.addf %57, %73 : vector<16x16xf32>
    %cst_23 = arith.constant dense<0.000000e+00> : vector<16x8xf32>
    %75 = tpu.matmul %73, %61, %cst_23 {dimension_numbers = #tpu.dot_dimension_numbers<[1], [0], [0], [1], [0, 0, 1, 1], [], []>} : vector<16x16xf32>, vector<16x8xf32>, vector<16x8xf32> -> vector<16x8xf32>
    %76 = tpu.concatenate %24, %41, %58, %75 in 1 : vector<16x8xf32>, vector<16x8xf32>, vector<16x8xf32>, vector<16x8xf32> -> vector<16x32xf32>
    %c0_24 = arith.constant 0 : index
    %c0_25 = arith.constant 0 : index
    %77 = vector.load %arg3[%c0_24, %c0_25] : memref<32x32xf32, #tpu.memory_space<vmem>>, vector<32x32xf32>
    %cst_26 = arith.constant dense<0.000000e+00> : vector<16x32xf32>
    %78 = tpu.matmul %76, %77, %cst_26 {dimension_numbers = #tpu.dot_dimension_numbers<[1], [0], [0], [1], [0, 0, 1, 1], [], []>} : vector<16x32xf32>, vector<32x32xf32>, vector<16x32xf32> -> vector<16x32xf32>
    %c0_27 = arith.constant 0 : index
    %c0_28 = arith.constant 0 : index
    %79 = vector.load %arg4[%c0_27, %c0_28] : memref<1x32xf32, #tpu.memory_space<vmem>>, vector<1x32xf32>
    %80 = vector.broadcast %79 : vector<1x32xf32> to vector<16x32xf32>
    %81 = arith.addf %78, %80 : vector<16x32xf32>
    %c0_29 = arith.constant 0 : index
    %c0_30 = arith.constant 0 : index
    %82 = vector.load %arg7[%c0_29, %c0_30] : memref<16x32xf32, #tpu.memory_space<vmem>>, vector<16x32xf32>
    tpu.vector_store %arg7[%c0_29, %c0_30], %81 {strides = array<i32>} : memref<16x32xf32, #tpu.memory_space<vmem>>, vector<16x32xf32>,
    %cst_31 = arith.constant 2.500000e-01 : f32
    %83 = vector.broadcast %cst_31 : f32 to vector<16x16xf32>
    %84 = arith.mulf %74, %83 : vector<16x16xf32>
    %c0_32 = arith.constant 0 : index
    %c0_33 = arith.constant 0 : index
    %c0_34 = arith.constant 0 : index
    %85 = vector.load %arg6[%c0_32, %c0_33, %c0_34] : memref<2x8x16xf32, #tpu.memory_space<vmem>>, vector<2x8x16xf32>
    %86 = vector.shape_cast %85 : vector<2x8x16xf32> to vector<16x16xf32>
    %cst_35 = arith.constant dense<0.000000e+00> : vector<16x16xf32>
    %87 = tpu.matmul %86, %84, %cst_35 {dimension_numbers = #tpu.dot_dimension_numbers<[1], [0], [0], [1], [0, 0, 1, 1], [], []>} : vector<16x16xf32>, vector<16x16xf32>, vector<16x16xf32> -> vector<16x16xf32>
    %88 = vector.shape_cast %87 : vector<16x16xf32> to vector<2x8x16xf32>
    "tpu.trace_start"() <{level = 10 : i32, message = "nac,nbc->nab"}> : () -> ()
    %cst_36 = arith.constant dense<0.000000e+00> : vector<2x8x8xf32>
    %89 = tpu.matmul %88, %85, %cst_36 {dimension_numbers = #tpu.dot_dimension_numbers<[2], [2], [1], [1], [0, 0, 0, 1, 1, 1], [0], [0]>} : vector<2x8x16xf32>, vector<2x8x16xf32>, vector<2x8x8xf32> -> vector<2x8x8xf32>
    "tpu.trace_stop"() : () -> ()
    %c0_37 = arith.constant 0 : index
    %c0_38 = arith.constant 0 : index
    %c0_39 = arith.constant 0 : index
    %90 = vector.load %arg8[%c0_37, %c0_38, %c0_39] : memref<2x8x8xf32, #tpu.memory_space<vmem>>, vector<2x8x8xf32>
    tpu.vector_store %arg8[%c0_37, %c0_38, %c0_39], %89 {strides = array<i32>} : memref<2x8x8xf32, #tpu.memory_space<vmem>>, vector<2x8x8xf32>,
    return
  }
}

</mosaic_0001>

<llo_original>
// kernel: multihead_self_attention.1
$region0: #{multihead_self_attention.1}
  #allocation0 [shape = 'u32[]', space=smem, size = 0x4, offset = 0x4, fixed_abs, tag = 'smem constant byte address 0x4 - core index']
  #allocation1 [shape = 'u32[144,128]{1,0:T(1,128)}', space=vmem, size = 0x12000, scoped, tag = 'internal scratch']
  %s0 = inlined_call_operand.hbm [shape: f32[16,32], index: 0, kind: input, shape index: {}]
  %s1 = inlined_call_operand.hbm [shape: f32[32,96], index: 1, kind: input, shape index: {}]
  %s2 = inlined_call_operand.vmem [shape: f32[1,96], index: 2, kind: input, shape index: {}]
  %s3 = inlined_call_operand.hbm [shape: f32[32,32], index: 3, kind: input, shape index: {}]
  %s4 = inlined_call_operand.vmem [shape: f32[1,32], index: 4, kind: input, shape index: {}]
  %s5 = inlined_call_operand.hbm [shape: f32[16,16], index: 5, kind: input, shape index: {}]
  %s6 = inlined_call_operand.vmem [shape: f32[2,8,16], index: 6, kind: input, shape index: {}]
  %s7 = inlined_call_operand.hbm [shape: f32[16,32], index: 7, kind: output, shape index: {0}]
  %s8 = inlined_call_operand.hbm [shape: f32[2,8,8], index: 8, kind: output, shape index: {1}]
  %9 = xla_tuple %s7, %s8
  %s10 = sld [smem:[#allocation0]]
  $region62: #{multihead_self_attention.1} parent=0
    _
  %s12 = ssub.s32 1, %s10
  %s13 = scalar_select 0, %s12, %s10
  $region1: #{multihead_self_attention.1} parent=0
    #allocation2 [shape = 'u8[8192]{0}', space=vmem, size = 0x2000, scoped, tag = 'input window, operand 0, single buffered']
    #allocation3 [shape = 's32[1]{0}', space=sflag, size = 0x4, scoped, tag = 'scoped memory for multihead_self_attention.1']
    #allocation4 [shape = 's32[1]{0}', space=sflag, size = 0x4, scoped, tag = 'scoped memory for multihead_self_attention.1']
    #allocation5 [shape = 'u8[16384]{0}', space=vmem, size = 0x4000, scoped, tag = 'input window, operand 1, single buffered']
    #allocation6 [shape = 's32[1]{0}', space=sflag, size = 0x4, scoped, tag = 'scoped memory for multihead_self_attention.1']
    #allocation7 [shape = 'u8[16384]{0}', space=vmem, size = 0x4000, scoped, tag = 'input window, operand 3, single buffered']
    #allocation8 [shape = 'u8[8192]{0}', space=vmem, size = 0x2000, scoped, tag = 'input window, operand 5, single buffered']
    #allocation9 [shape = 's32[1]{0}', space=sflag, size = 0x4, scoped, tag = 'scoped memory for multihead_self_attention.1']
    #allocation10 [shape = 'u8[8192]{0}', space=vmem, size = 0x2000, scoped, tag = 'output window, operand 0, single buffered']
    #allocation11 [shape = 'u8[8192]{0}', space=vmem, size = 0x2000, scoped, tag = 'output window, operand 1, single buffered']
    #allocation12 [shape = 's32[1]{0}', space=sflag, size = 0x4, scoped, tag = 'scoped memory for multihead_self_attention.1']
    %14 = vsyncpa [#allocation3], 0
    %15 = vsyncpa [#allocation6], 0
    %16 = vsyncpa [#allocation9], 0
    %17 = vsyncpa [#allocation4], 0
    %18 = vsyncpa [#allocation12], 0
    // Predicated region
    $region2: #{multihead_self_attention.1} parent=1 // pred_check
      _
    $region3: #{multihead_self_attention.1} parent=1 // pred_check_branch
      %20 = sbr.rel (0) target = $region5
    $region4: #{multihead_self_attention.1} parent=1 // pred_region
      %s22 = ssub.s32 256, 256
      %23 = vsyncadd [#allocation3], %s22
      %s24 = sshll.u32 [#allocation2], 4
      %s25 = int_to_ptr.vmem [resolvable:$true] %s24
      %30 = dma.hbm_to_vmem [thread:$0]  %s0, 256, %s25, [#allocation3], 128, 128, 8
    $region5: #{multihead_self_attention.1} parent=1 // pred_fallthru
      _
    // Predicated region
    $region6: #{multihead_self_attention.1} parent=1 // pred_check
      _
    $region7: #{multihead_self_attention.1} parent=1 // pred_check_branch
      %32 = sbr.rel (0) target = $region9
    $region8: #{multihead_self_attention.1} parent=1 // pred_region
      %s34 = ssub.s32 512, 512
      %35 = vsyncadd [#allocation6], %s34
      %s36 = sshll.u32 [#allocation5], 4
      %s37 = int_to_ptr.vmem [resolvable:$true] %s36
      %42 = dma.hbm_to_vmem [thread:$0]  %s1, 512, %s37, [#allocation6], 128, 128, 8
    $region9: #{multihead_self_attention.1} parent=1 // pred_fallthru
      _
    // Predicated region
    $region10: #{multihead_self_attention.1} parent=1 // pred_check
      _
    $region11: #{multihead_self_attention.1} parent=1 // pred_check_branch
      %44 = sbr.rel (0) target = $region13
    $region12: #{multihead_self_attention.1} parent=1 // pred_region
      _
    $region13: #{multihead_self_attention.1} parent=1 // pred_fallthru
      _
    // Predicated region
    $region14: #{multihead_self_attention.1} parent=1 // pred_check
      _
    $region15: #{multihead_self_attention.1} parent=1 // pred_check_branch
      %46 = sbr.rel (0) target = $region17
    $region16: #{multihead_self_attention.1} parent=1 // pred_region
      %s48 = ssub.s32 512, 512
      %49 = vsyncadd [#allocation6], %s48
      %s50 = sshll.u32 [#allocation7], 4
      %s51 = int_to_ptr.vmem [resolvable:$true] %s50
      %56 = dma.hbm_to_vmem [thread:$0]  %s3, 512, %s51, [#allocation6], 128, 128, 8
    $region17: #{multihead_self_attention.1} parent=1 // pred_fallthru
      _
    // Predicated region
    $region18: #{multihead_self_attention.1} parent=1 // pred_check
      _
    $region19: #{multihead_self_attention.1} parent=1 // pred_check_branch
      %58 = sbr.rel (0) target = $region21
    $region20: #{multihead_self_attention.1} parent=1 // pred_region
      _
    $region21: #{multihead_self_attention.1} parent=1 // pred_fallthru
      _
    // Predicated region
    $region22: #{multihead_self_attention.1} parent=1 // pred_check
      _
    $region23: #{multihead_self_attention.1} parent=1 // pred_check_branch
      %60 = sbr.rel (0) target = $region25
    $region24: #{multihead_self_attention.1} parent=1 // pred_region
      %s62 = ssub.s32 256, 256
      %63 = vsyncadd [#allocation9], %s62
      %s64 = sshll.u32 [#allocation8], 4
      %s65 = int_to_ptr.vmem [resolvable:$true] %s64
      %70 = dma.hbm_to_vmem [thread:$0]  %s5, 256, %s65, [#allocation9], 128, 128, 8
    $region25: #{multihead_self_attention.1} parent=1 // pred_fallthru
      _
    // Predicated region
    $region26: #{multihead_self_attention.1} parent=1 // pred_check
      _
    $region27: #{multihead_self_attention.1} parent=1 // pred_check_branch
      %72 = sbr.rel (0) target = $region29
    $region28: #{multihead_self_attention.1} parent=1 // pred_region
      _
    $region29: #{multihead_self_attention.1} parent=1 // pred_fallthru
      _
    // Predicated region
    $region30: #{multihead_self_attention.1} parent=1 // pred_check
      _
    $region31: #{multihead_self_attention.1} parent=1 // pred_check_branch
      %74 = sbr.rel (0) target = $region33
    $region32: #{multihead_self_attention.1} parent=1 // pred_region
      %75 = dma.done [#allocation3], 256
    $region33: #{multihead_self_attention.1} parent=1 // pred_fallthru
      _
    // Predicated region
    $region34: #{multihead_self_attention.1} parent=1 // pred_check
      _
    $region35: #{multihead_self_attention.1} parent=1 // pred_check_branch
      %77 = sbr.rel (0) target = $region37
    $region36: #{multihead_self_attention.1} parent=1 // pred_region
      %78 = dma.done [#allocation6], 512
    $region37: #{multihead_self_attention.1} parent=1 // pred_fallthru
      _
    // Predicated region
    $region38: #{multihead_self_attention.1} parent=1 // pred_check
      _
    $region39: #{multihead_self_attention.1} parent=1 // pred_check_branch
      %80 = sbr.rel (0) target = $region41
    $region40: #{multihead_self_attention.1} parent=1 // pred_region
      %81 = dma.done [#allocation6], 512
    $region41: #{multihead_self_attention.1} parent=1 // pred_fallthru
      _
    // Predicated region
    $region42: #{multihead_self_attention.1} parent=1 // pred_check
      _
    $region43: #{multihead_self_attention.1} parent=1 // pred_check_branch
      %83 = sbr.rel (0) target = $region45
    $region44: #{multihead_self_attention.1} parent=1 // pred_region
      %84 = dma.done [#allocation9], 256
    $region45: #{multihead_self_attention.1} parent=1 // pred_fallthru
      _
    %v85 = vld [vmem:[#allocation2] sm:$0xff]
    %v86 = vld [vmem:[#allocation2 + $0x8] sm:$0xff]
    %v87 = vld [vmem:[#allocation5] sm:$0xff]
    %v88 = vld [vmem:[#allocation5 + $0x8] sm:$0xff]
    %v89 = vld [vmem:[#allocation5 + $0x10] sm:$0xff]
    %v90 = vld [vmem:[#allocation5 + $0x18] sm:$0xff]
    %v91 = vld [vmem:[%s2] sm:$0x1]
    %v93 = vlaneseq
    %v94 = vshrl.u32 %v93, 7
    %v95 = vsub.s32 0, %v94
    %v96 = vrot.slane %v91, %v95
    %vm98 = vcmask 261120
    %v100 = vsel %vm98, %v85, 0
    %v103 = vsel %vm98, %v86, 0
    %105 = vmatprep.subr.mxu0 0.0
    %106 = vmatpush1.msra.mxu0 %v87
    %107 = vmatprep.subr.mxu0 0.0
    %108 = vmatpush1.msra.mxu0 %v88
    %109 = vmatprep.subr.mxu0 0.0
    %110 = vmatpush1.msra.mxu0 %v89
    %111 = vmatprep.subr.mxu0 0.0
    %112 = vmatpush1.msra.mxu0 %v90
    %113 = vmatprep.subr.mxu0 0.0
    %114 = vmatpush1.msra.mxu0 0.0
    %115 = vmatprep.subr.mxu0 0.0
    %116 = vmatpush1.msra.mxu0 0.0
    %117 = vmatprep.subr.mxu0 0.0
    %118 = vmatpush1.msra.mxu0 0.0
    %119 = vmatprep.subr.mxu0 0.0
    %120 = vmatpush1.msra.mxu0 0.0
    %121 = vmatprep.subr.mxu0 0.0
    %122 = vmatpush1.msra.mxu0 0.0
    %123 = vmatprep.subr.mxu0 0.0
    %124 = vmatpush1.msra.mxu0 0.0
    %125 = vmatprep.subr.mxu0 0.0
    %126 = vmatpush1.msra.mxu0 0.0
    %127 = vmatprep.subr.mxu0 0.0
    %128 = vmatpush1.msra.mxu0 0.0
    %129 = vmatprep.subr.mxu0 0.0
    %130 = vmatpush1.msra.mxu0 0.0
    %131 = vmatprep.subr.mxu0 0.0
    %132 = vmatpush1.msra.mxu0 0.0
    %133 = vmatprep.subr.mxu0 0.0
    %134 = vmatpush1.msra.mxu0 0.0
    %135 = vmatprep.subr.mxu0 0.0
    %136 = vmatpush1.msra.mxu0 0.0
    %137 = vmatprep.subr.mxu0 0.0
    %138 = vmatpush1.msra.mxu0 0.0
    %139 = vmatprep.subr.mxu0 0.0
    %140 = vmatpush1.msra.mxu0 0.0
    %141 = vmatprep.subr.mxu0 0.0
    %142 = vmatpush1.msra.mxu0 0.0
    %143 = vmatprep.subr.mxu0 0.0
    %144 = vmatpush1.msra.mxu0 0.0
    %145 = vmatprep.subr.mxu0 0.0
    %146 = vmatpush1.msra.mxu0 0.0
    %147 = vmatprep.subr.mxu0 0.0
    %148 = vmatpush1.msra.mxu0 0.0
    %149 = vmatprep.subr.mxu0 0.0
    %150 = vmatpush1.msra.mxu0 0.0
    %151 = vmatprep.subr.mxu0 0.0
    %152 = vmatpush1.msra.mxu0 0.0
    %153 = vmatprep.subr.mxu0 0.0
    %154 = vmatpush1.msra.mxu0 0.0
    %155 = vmatprep.subr.mxu0 0.0
    %156 = vmatpush1.msra.mxu0 0.0
    %157 = vmatprep.subr.mxu0 0.0
    %158 = vmatpush1.msra.mxu0 0.0
    %159 = vmatprep.subr.mxu0 0.0
    %160 = vmatpush1.msra.mxu0 0.0
    %161 = vmatprep.subr.mxu0 0.0
    %162 = vmatpush1.msra.mxu0 0.0
    %163 = vmatprep.subr.mxu0 0.0
    %164 = vmatpush1.msra.mxu0 0.0
    %165 = vmatprep.subr.mxu0 0.0
    %166 = vmatpush1.msra.mxu0 0.0
    %167 = vmatprep.subr.mxu0 0.0
    %168 = vmatpush1.msra.mxu0 0.0
    %169 = vmatprep.mubr.f32.mxu0 0.0
    %170 = vmatmul.mubr.f32.gmra.mrb[0].mxu0 %v100
    %v171 = vpop.f32.mrb[0].mxu0
    %v172 = vadd.f32 %v96, %v171
    %v173 = vpop.f32.mrb[0].mxu0
    %174 = vmatprep.mubr.f32.mxu0 0.0
    %175 = vmatmul.mubr.f32.gmra.mrb[0].mxu0 %v103
    %v176 = vpop.f32.mrb[0].mxu0
    %v177 = vadd.f32 %v96, %v176
    %v178 = vpop.f32.mrb[0].mxu0
    %179 = vdwg.mxu0
    %v180 = vld [vmem:[#allocation8] sm:$0xff]
    %v181 = vld [vmem:[#allocation8 + $0x8] sm:$0xff]
    %184 = vrot.lane.b32.xlu0 %v172, 96
    %v185 = vpop.permute.xlu0 %184
    %186 = vrot.lane.b32.xlu0 %v177, 96
    %v187 = vpop.permute.xlu0 %186
    %vm188 = vcmask 64512
    %v189 = vsel %vm188, %v172, 0
    %v191 = vsel %vm188, %v177, 0
    %v193 = vsel %vm188, %v185, 0
    %v195 = vsel %vm188, %v187, 0
    %197 = vmatprep.subr.mxu0 0.0
    %198 = vmatpush1.xpose.msra.mxu0 %v193
    %199 = vmatprep.subr.mxu0 0.0
    %200 = vmatpush1.xpose.msra.mxu0 %v195
    %201 = vmatprep.subr.mxu0 0.0
    %202 = vmatpush1.xpose.msra.mxu0 0.0
    %203 = vmatprep.subr.mxu0 0.0
    %204 = vmatpush1.xpose.msra.mxu0 0.0
    %205 = vmatprep.subr.mxu0 0.0
    %206 = vmatpush1.xpose.msra.mxu0 0.0
    %207 = vmatprep.subr.mxu0 0.0
    %208 = vmatpush1.xpose.msra.mxu0 0.0
    %209 = vmatprep.subr.mxu0 0.0
    %210 = vmatpush1.xpose.msra.mxu0 0.0
    %211 = vmatprep.subr.mxu0 0.0
    %212 = vmatpush1.xpose.msra.mxu0 0.0
    %213 = vmatprep.subr.mxu0 0.0
    %214 = vmatpush1.xpose.msra.mxu0 0.0
    %215 = vmatprep.subr.mxu0 0.0
    %216 = vmatpush1.xpose.msra.mxu0 0.0
    %217 = vmatprep.subr.mxu0 0.0
    %218 = vmatpush1.xpose.msra.mxu0 0.0
    %219 = vmatprep.subr.mxu0 0.0
    %220 = vmatpush1.xpose.msra.mxu0 0.0
    %221 = vmatprep.subr.mxu0 0.0
    %222 = vmatpush1.xpose.msra.mxu0 0.0
    %223 = vmatprep.subr.mxu0 0.0
    %224 = vmatpush1.xpose.msra.mxu0 0.0
    %225 = vmatprep.subr.mxu0 0.0
    %226 = vmatpush1.xpose.msra.mxu0 0.0
    %227 = vmatprep.subr.mxu0 0.0
    %228 = vmatpush1.xpose.msra.mxu0 0.0
    %229 = vmatprep.subr.mxu0 0.0
    %230 = vmatpush1.xpose.msra.mxu0 0.0
    %231 = vmatprep.subr.mxu0 0.0
    %232 = vmatpush1.xpose.msra.mxu0 0.0
    %233 = vmatprep.subr.mxu0 0.0
    %234 = vmatpush1.xpose.msra.mxu0 0.0
    %235 = vmatprep.subr.mxu0 0.0
    %236 = vmatpush1.xpose.msra.mxu0 0.0
    %237 = vmatprep.subr.mxu0 0.0
    %238 = vmatpush1.xpose.msra.mxu0 0.0
    %239 = vmatprep.subr.mxu0 0.0
    %240 = vmatpush1.xpose.msra.mxu0 0.0
    %241 = vmatprep.subr.mxu0 0.0
    %242 = vmatpush1.xpose.msra.mxu0 0.0
    %243 = vmatprep.subr.mxu0 0.0
    %244 = vmatpush1.xpose.msra.mxu0 0.0
    %245 = vmatprep.subr.mxu0 0.0
    %246 = vmatpush1.xpose.msra.mxu0 0.0
    %247 = vmatprep.subr.mxu0 0.0
    %248 = vmatpush1.xpose.msra.mxu0 0.0
    %249 = vmatprep.subr.mxu0 0.0
    %250 = vmatpush1.xpose.msra.mxu0 0.0
    %251 = vmatprep.subr.mxu0 0.0
    %252 = vmatpush1.xpose.msra.mxu0 0.0
    %253 = vmatprep.subr.mxu0 0.0
    %254 = vmatpush1.xpose.msra.mxu0 0.0
    %255 = vmatprep.subr.mxu0 0.0
    %256 = vmatpush1.xpose.msra.mxu0 0.0
    %257 = vmatprep.subr.mxu0 0.0
    %258 = vmatpush1.xpose.msra.mxu0 0.0
    %259 = vmatprep.subr.mxu0 0.0
    %260 = vmatpush1.xpose.msra.mxu0 0.0
    %261 = vmatprep.mubr.f32.mxu0 0.0
    %262 = vmatmul.mubr.f32.gmra.mrb[0].mxu0 %v189
    %v263 = vpop.f32.mrb[0].mxu0
    %v264 = vadd.f32 %v180, %v263
    %v265 = vpop.f32.mrb[0].mxu0
    %266 = vmatprep.mubr.f32.mxu0 0.0
    %267 = vmatmul.mubr.f32.gmra.mrb[0].mxu0 %v191
    %v268 = vpop.f32.mrb[0].mxu0
    %v269 = vadd.f32 %v181, %v268
    %v270 = vpop.f32.mrb[0].mxu0
    %271 = vdwg.mxu0
    %vm272 = vcmask 130048
    %v273 = vsel %vm272, %v264, -inf
    %274 = vmax.xlane.f32.xlu0 %v273
    %v275 = vpop.xlane.xlu0 %274
    %v276 = vsel %vm272, %v269, -inf
    %277 = vmax.xlane.f32.xlu0 %v276
    %v278 = vpop.xlane.xlu0 %277
    %v279 = vsub.f32 %v264, %v275
    %v280 = vsub.f32 %v269, %v278
    %v281 = vmul.f32 %v279, 1.442695
    %v282 = vpow.pop %v281
    %v283 = vmul.f32 %v280, 1.442695
    %v284 = vpow.pop %v283
    %v285 = vsel %vm272, %v282, 0.0
    %286 = vadd.xlane.f32.xlu0 %v285
    %v287 = vpop.xlane.xlu0 %286
    %v288 = vsel %vm272, %v284, 0.0
    %289 = vadd.xlane.f32.xlu0 %v288
    %v290 = vpop.xlane.xlu0 %289
    %v291 = vrcp.pop %v287
    %v292 = vrcp.pop %v290
    %v293 = vmul.f32 %v282, %v291
    %v294 = vmul.f32 %v284, %v292
    %v295 = vadd.f32 %v293, 0.0
    %v296 = vadd.f32 %v294, 0.0
    %297 = vrot.lane.b32.xlu0 %v172, 64
    %v298 = vpop.permute.xlu0 %297
    %299 = vrot.lane.b32.xlu0 %v177, 64
    %v300 = vpop.permute.xlu0 %299
    %v304 = vsel %vm272, %v293, 0
    %v307 = vsel %vm272, %v294, 0
    %309 = vmatprep.subr.mxu0 0.0
    %310 = vmatpush1.msra.mxu0 %v298
    %311 = vmatprep.subr.mxu0 0.0
    %312 = vmatpush1.msra.mxu0 %v300
    %313 = vmatprep.subr.mxu0 0.0
    %314 = vmatpush1.msra.mxu0 0.0
    %315 = vmatprep.subr.mxu0 0.0
    %316 = vmatpush1.msra.mxu0 0.0
    %317 = vmatprep.subr.mxu0 0.0
    %318 = vmatpush1.msra.mxu0 0.0
    %319 = vmatprep.subr.mxu0 0.0
    %320 = vmatpush1.msra.mxu0 0.0
    %321 = vmatprep.subr.mxu0 0.0
    %322 = vmatpush1.msra.mxu0 0.0
    %323 = vmatprep.subr.mxu0 0.0
    %324 = vmatpush1.msra.mxu0 0.0
    %325 = vmatprep.subr.mxu0 0.0
    %326 = vmatpush1.msra.mxu0 0.0
    %327 = vmatprep.subr.mxu0 0.0
    %328 = vmatpush1.msra.mxu0 0.0
    %329 = vmatprep.subr.mxu0 0.0
    %330 = vmatpush1.msra.mxu0 0.0
    %331 = vmatprep.subr.mxu0 0.0
    %332 = vmatpush1.msra.mxu0 0.0
    %333 = vmatprep.subr.mxu0 0.0
    %334 = vmatpush1.msra.mxu0 0.0
    %335 = vmatprep.subr.mxu0 0.0
    %336 = vmatpush1.msra.mxu0 0.0
    %337 = vmatprep.subr.mxu0 0.0
    %338 = vmatpush1.msra.mxu0 0.0
    %339 = vmatprep.subr.mxu0 0.0
    %340 = vmatpush1.msra.mxu0 0.0
    %341 = vmatprep.subr.mxu0 0.0
    %342 = vmatpush1.msra.mxu0 0.0
    %343 = vmatprep.subr.mxu0 0.0
    %344 = vmatpush1.msra.mxu0 0.0
    %345 = vmatprep.subr.mxu0 0.0
    %346 = vmatpush1.msra.mxu0 0.0
    %347 = vmatprep.subr.mxu0 0.0
    %348 = vmatpush1.msra.mxu0 0.0
    %349 = vmatprep.subr.mxu0 0.0
    %350 = vmatpush1.msra.mxu0 0.0
    %351 = vmatprep.subr.mxu0 0.0
    %352 = vmatpush1.msra.mxu0 0.0
    %353 = vmatprep.subr.mxu0 0.0
    %354 = vmatpush1.msra.mxu0 0.0
    %355 = vmatprep.subr.mxu0 0.0
    %356 = vmatpush1.msra.mxu0 0.0
    %357 = vmatprep.subr.mxu0 0.0
    %358 = vmatpush1.msra.mxu0 0.0
    %359 = vmatprep.subr.mxu0 0.0
    %360 = vmatpush1.msra.mxu0 0.0
    %361 = vmatprep.subr.mxu0 0.0
    %362 = vmatpush1.msra.mxu0 0.0
    %363 = vmatprep.subr.mxu0 0.0
    %364 = vmatpush1.msra.mxu0 0.0
    %365 = vmatprep.subr.mxu0 0.0
    %366 = vmatpush1.msra.mxu0 0.0
    %367 = vmatprep.subr.mxu0 0.0
    %368 = vmatpush1.msra.mxu0 0.0
    %369 = vmatprep.subr.mxu0 0.0
    %370 = vmatpush1.msra.mxu0 0.0
    %371 = vmatprep.subr.mxu0 0.0
    %372 = vmatpush1.msra.mxu0 0.0
    %373 = vmatprep.mubr.f32.mxu0 0.0
    %374 = vmatmul.mubr.f32.gmra.mrb[0].mxu0 %v304
    %v375 = vpop.f32.mrb[0].mxu0
    %v376 = vadd.f32 0.0, %v375
    %v377 = vpop.f32.mrb[0].mxu0
    %378 = vmatprep.mubr.f32.mxu0 0.0
    %379 = vmatmul.mubr.f32.gmra.mrb[0].mxu0 %v307
    %v380 = vpop.f32.mrb[0].mxu0
    %v381 = vadd.f32 0.0, %v380
    %v382 = vpop.f32.mrb[0].mxu0
    %383 = vdwg.mxu0
    %384 = vrot.lane.b32.xlu0 %v172, 120
    %v385 = vpop.permute.xlu0 %384
    %386 = vrot.lane.b32.xlu0 %v177, 120
    %v387 = vpop.permute.xlu0 %386
    %388 = vrot.lane.b32.xlu0 %v172, 88
    %v389 = vpop.permute.xlu0 %388
    %390 = vrot.lane.b32.xlu0 %v177, 88
    %v391 = vpop.permute.xlu0 %390
    %v392 = vsel %vm188, %v385, 0
    %v394 = vsel %vm188, %v387, 0
    %v396 = vsel %vm188, %v389, 0
    %v398 = vsel %vm188, %v391, 0
    %400 = vmatprep.subr.mxu0 0.0
    %401 = vmatpush1.xpose.msra.mxu0 %v396
    %402 = vmatprep.subr.mxu0 0.0
    %403 = vmatpush1.xpose.msra.mxu0 %v398
    %404 = vmatprep.subr.mxu0 0.0
    %405 = vmatpush1.xpose.msra.mxu0 0.0
    %406 = vmatprep.subr.mxu0 0.0
    %407 = vmatpush1.xpose.msra.mxu0 0.0
    %408 = vmatprep.subr.mxu0 0.0
    %409 = vmatpush1.xpose.msra.mxu0 0.0
    %410 = vmatprep.subr.mxu0 0.0
    %411 = vmatpush1.xpose.msra.mxu0 0.0
    %412 = vmatprep.subr.mxu0 0.0
    %413 = vmatpush1.xpose.msra.mxu0 0.0
    %414 = vmatprep.subr.mxu0 0.0
    %415 = vmatpush1.xpose.msra.mxu0 0.0
    %416 = vmatprep.subr.mxu0 0.0
    %417 = vmatpush1.xpose.msra.mxu0 0.0
    %418 = vmatprep.subr.mxu0 0.0
    %419 = vmatpush1.xpose.msra.mxu0 0.0
    %420 = vmatprep.subr.mxu0 0.0
    %421 = vmatpush1.xpose.msra.mxu0 0.0
    %422 = vmatprep.subr.mxu0 0.0
    %423 = vmatpush1.xpose.msra.mxu0 0.0
    %424 = vmatprep.subr.mxu0 0.0
    %425 = vmatpush1.xpose.msra.mxu0 0.0
    %426 = vmatprep.subr.mxu0 0.0
    %427 = vmatpush1.xpose.msra.mxu0 0.0
    %428 = vmatprep.subr.mxu0 0.0
    %429 = vmatpush1.xpose.msra.mxu0 0.0
    %430 = vmatprep.subr.mxu0 0.0
    %431 = vmatpush1.xpose.msra.mxu0 0.0
    %432 = vmatprep.subr.mxu0 0.0
    %433 = vmatpush1.xpose.msra.mxu0 0.0
    %434 = vmatprep.subr.mxu0 0.0
    %435 = vmatpush1.xpose.msra.mxu0 0.0
    %436 = vmatprep.subr.mxu0 0.0
    %437 = vmatpush1.xpose.msra.mxu0 0.0
    %438 = vmatprep.subr.mxu0 0.0
    %439 = vmatpush1.xpose.msra.mxu0 0.0
    %440 = vmatprep.subr.mxu0 0.0
    %441 = vmatpush1.xpose.msra.mxu0 0.0
    %442 = vmatprep.subr.mxu0 0.0
    %443 = vmatpush1.xpose.msra.mxu0 0.0
    %444 = vmatprep.subr.mxu0 0.0
    %445 = vmatpush1.xpose.msra.mxu0 0.0
    %446 = vmatprep.subr.mxu0 0.0
    %447 = vmatpush1.xpose.msra.mxu0 0.0
    %448 = vmatprep.subr.mxu0 0.0
    %449 = vmatpush1.xpose.msra.mxu0 0.0
    %450 = vmatprep.subr.mxu0 0.0
    %451 = vmatpush1.xpose.msra.mxu0 0.0
    %452 = vmatprep.subr.mxu0 0.0
    %453 = vmatpush1.xpose.msra.mxu0 0.0
    %454 = vmatprep.subr.mxu0 0.0
    %455 = vmatpush1.xpose.msra.mxu0 0.0
    %456 = vmatprep.subr.mxu0 0.0
    %457 = vmatpush1.xpose.msra.mxu0 0.0
    %458 = vmatprep.subr.mxu0 0.0
    %459 = vmatpush1.xpose.msra.mxu0 0.0
    %460 = vmatprep.subr.mxu0 0.0
    %461 = vmatpush1.xpose.msra.mxu0 0.0
    %462 = vmatprep.subr.mxu0 0.0
    %463 = vmatpush1.xpose.msra.mxu0 0.0
    %464 = vmatprep.mubr.f32.mxu0 0.0
    %465 = vmatmul.mubr.f32.gmra.mrb[0].mxu0 %v392
    %v466 = vpop.f32.mrb[0].mxu0
    %v467 = vadd.f32 %v180, %v466
    %v468 = vpop.f32.mrb[0].mxu0
    %469 = vmatprep.mubr.f32.mxu0 0.0
    %470 = vmatmul.mubr.f32.gmra.mrb[0].mxu0 %v394
    %v471 = vpop.f32.mrb[0].mxu0
    %v472 = vadd.f32 %v181, %v471
    %v473 = vpop.f32.mrb[0].mxu0
    %474 = vdwg.mxu0
    %v475 = vsel %vm272, %v467, -inf
    %476 = vmax.xlane.f32.xlu0 %v475
    %v477 = vpop.xlane.xlu0 %476
    %v478 = vsel %vm272, %v472, -inf
    %479 = vmax.xlane.f32.xlu0 %v478
    %v480 = vpop.xlane.xlu0 %479
    %v481 = vsub.f32 %v467, %v477
    %v482 = vsub.f32 %v472, %v480
    %v483 = vmul.f32 %v481, 1.442695
    %v484 = vpow.pop %v483
    %v485 = vmul.f32 %v482, 1.442695
    %v486 = vpow.pop %v485
    %v487 = vsel %vm272, %v484, 0.0
    %488 = vadd.xlane.f32.xlu0 %v487
    %v489 = vpop.xlane.xlu0 %488
    %v490 = vsel %vm272, %v486, 0.0
    %491 = vadd.xlane.f32.xlu0 %v490
    %v492 = vpop.xlane.xlu0 %491
    %v493 = vrcp.pop %v489
    %v494 = vrcp.pop %v492
    %v495 = vmul.f32 %v484, %v493
    %v496 = vmul.f32 %v486, %v494
    %v497 = vadd.f32 %v295, %v495
    %v498 = vadd.f32 %v296, %v496
    %499 = vrot.lane.b32.xlu0 %v172, 56
    %v500 = vpop.permute.xlu0 %499
    %501 = vrot.lane.b32.xlu0 %v177, 56
    %v502 = vpop.permute.xlu0 %501
    %v506 = vsel %vm272, %v495, 0
    %v509 = vsel %vm272, %v496, 0
    %511 = vmatprep.subr.mxu0 0.0
    %512 = vmatpush1.msra.mxu0 %v500
    %513 = vmatprep.subr.mxu0 0.0
    %514 = vmatpush1.msra.mxu0 %v502
    %515 = vmatprep.subr.mxu0 0.0
    %516 = vmatpush1.msra.mxu0 0.0
    %517 = vmatprep.subr.mxu0 0.0
    %518 = vmatpush1.msra.mxu0 0.0
    %519 = vmatprep.subr.mxu0 0.0
    %520 = vmatpush1.msra.mxu0 0.0
    %521 = vmatprep.subr.mxu0 0.0
    %522 = vmatpush1.msra.mxu0 0.0
    %523 = vmatprep.subr.mxu0 0.0
    %524 = vmatpush1.msra.mxu0 0.0
    %525 = vmatprep.subr.mxu0 0.0
    %526 = vmatpush1.msra.mxu0 0.0
    %527 = vmatprep.subr.mxu0 0.0
    %528 = vmatpush1.msra.mxu0 0.0
    %529 = vmatprep.subr.mxu0 0.0
    %530 = vmatpush1.msra.mxu0 0.0
    %531 = vmatprep.subr.mxu0 0.0
    %532 = vmatpush1.msra.mxu0 0.0
    %533 = vmatprep.subr.mxu0 0.0
    %534 = vmatpush1.msra.mxu0 0.0
    %535 = vmatprep.subr.mxu0 0.0
    %536 = vmatpush1.msra.mxu0 0.0
    %537 = vmatprep.subr.mxu0 0.0
    %538 = vmatpush1.msra.mxu0 0.0
    %539 = vmatprep.subr.mxu0 0.0
    %540 = vmatpush1.msra.mxu0 0.0
    %541 = vmatprep.subr.mxu0 0.0
    %542 = vmatpush1.msra.mxu0 0.0
    %543 = vmatprep.subr.mxu0 0.0
    %544 = vmatpush1.msra.mxu0 0.0
    %545 = vmatprep.subr.mxu0 0.0
    %546 = vmatpush1.msra.mxu0 0.0
    %547 = vmatprep.subr.mxu0 0.0
    %548 = vmatpush1.msra.mxu0 0.0
    %549 = vmatprep.subr.mxu0 0.0
    %550 = vmatpush1.msra.mxu0 0.0
    %551 = vmatprep.subr.mxu0 0.0
    %552 = vmatpush1.msra.mxu0 0.0
    %553 = vmatprep.subr.mxu0 0.0
    %554 = vmatpush1.msra.mxu0 0.0
    %555 = vmatprep.subr.mxu0 0.0
    %556 = vmatpush1.msra.mxu0 0.0
    %557 = vmatprep.subr.mxu0 0.0
    %558 = vmatpush1.msra.mxu0 0.0
    %559 = vmatprep.subr.mxu0 0.0
    %560 = vmatpush1.msra.mxu0 0.0
    %561 = vmatprep.subr.mxu0 0.0
    %562 = vmatpush1.msra.mxu0 0.0
    %563 = vmatprep.subr.mxu0 0.0
    %564 = vmatpush1.msra.mxu0 0.0
    %565 = vmatprep.subr.mxu0 0.0
    %566 = vmatpush1.msra.mxu0 0.0
    %567 = vmatprep.subr.mxu0 0.0
    %568 = vmatpush1.msra.mxu0 0.0
    %569 = vmatprep.subr.mxu0 0.0
    %570 = vmatpush1.msra.mxu0 0.0
    %571 = vmatprep.subr.mxu0 0.0
    %572 = vmatpush1.msra.mxu0 0.0
    %573 = vmatprep.subr.mxu0 0.0
    %574 = vmatpush1.msra.mxu0 0.0
    %575 = vmatprep.mubr.f32.mxu0 0.0
    %576 = vmatmul.mubr.f32.gmra.mrb[0].mxu0 %v506
    %v577 = vpop.f32.mrb[0].mxu0
    %v578 = vadd.f32 0.0, %v577
    %v579 = vpop.f32.mrb[0].mxu0
    %580 = vmatprep.mubr.f32.mxu0 0.0
    %581 = vmatmul.mubr.f32.gmra.mrb[0].mxu0 %v509
    %v582 = vpop.f32.mrb[0].mxu0
    %v583 = vadd.f32 0.0, %v582
    %v584 = vpop.f32.mrb[0].mxu0
    %585 = vdwg.mxu0
    %586 = vrot.lane.b32.xlu0 %v172, 112
    %v587 = vpop.permute.xlu0 %586
    %588 = vrot.lane.b32.xlu0 %v177, 112
    %v589 = vpop.permute.xlu0 %588
    %590 = vrot.lane.b32.xlu0 %v172, 80
    %v591 = vpop.permute.xlu0 %590
    %592 = vrot.lane.b32.xlu0 %v177, 80
    %v593 = vpop.permute.xlu0 %592
    %v594 = vsel %vm188, %v587, 0
    %v596 = vsel %vm188, %v589, 0
    %v598 = vsel %vm188, %v591, 0
    %v600 = vsel %vm188, %v593, 0
    %602 = vmatprep.subr.mxu0 0.0
    %603 = vmatpush1.xpose.msra.mxu0 %v598
    %604 = vmatprep.subr.mxu0 0.0
    %605 = vmatpush1.xpose.msra.mxu0 %v600
    %606 = vmatprep.subr.mxu0 0.0
    %607 = vmatpush1.xpose.msra.mxu0 0.0
    %608 = vmatprep.subr.mxu0 0.0
    %609 = vmatpush1.xpose.msra.mxu0 0.0
    %610 = vmatprep.subr.mxu0 0.0
    %611 = vmatpush1.xpose.msra.mxu0 0.0
    %612 = vmatprep.subr.mxu0 0.0
    %613 = vmatpush1.xpose.msra.mxu0 0.0
    %614 = vmatprep.subr.mxu0 0.0
    %615 = vmatpush1.xpose.msra.mxu0 0.0
    %616 = vmatprep.subr.mxu0 0.0
    %617 = vmatpush1.xpose.msra.mxu0 0.0
    %618 = vmatprep.subr.mxu0 0.0
    %619 = vmatpush1.xpose.msra.mxu0 0.0
    %620 = vmatprep.subr.mxu0 0.0
    %621 = vmatpush1.xpose.msra.mxu0 0.0
    %622 = vmatprep.subr.mxu0 0.0
    %623 = vmatpush1.xpose.msra.mxu0 0.0
    %624 = vmatprep.subr.mxu0 0.0
    %625 = vmatpush1.xpose.msra.mxu0 0.0
    %626 = vmatprep.subr.mxu0 0.0
    %627 = vmatpush1.xpose.msra.mxu0 0.0
    %628 = vmatprep.subr.mxu0 0.0
    %629 = vmatpush1.xpose.msra.mxu0 0.0
    %630 = vmatprep.subr.mxu0 0.0
    %631 = vmatpush1.xpose.msra.mxu0 0.0
    %632 = vmatprep.subr.mxu0 0.0
    %633 = vmatpush1.xpose.msra.mxu0 0.0
    %634 = vmatprep.subr.mxu0 0.0
    %635 = vmatpush1.xpose.msra.mxu0 0.0
    %636 = vmatprep.subr.mxu0 0.0
    %637 = vmatpush1.xpose.msra.mxu0 0.0
    %638 = vmatprep.subr.mxu0 0.0
    %639 = vmatpush1.xpose.msra.mxu0 0.0
    %640 = vmatprep.subr.mxu0 0.0
    %641 = vmatpush1.xpose.msra.mxu0 0.0
    %642 = vmatprep.subr.mxu0 0.0
    %643 = vmatpush1.xpose.msra.mxu0 0.0
    %644 = vmatprep.subr.mxu0 0.0
    %645 = vmatpush1.xpose.msra.mxu0 0.0
    %646 = vmatprep.subr.mxu0 0.0
    %647 = vmatpush1.xpose.msra.mxu0 0.0
    %648 = vmatprep.subr.mxu0 0.0
    %649 = vmatpush1.xpose.msra.mxu0 0.0
    %650 = vmatprep.subr.mxu0 0.0
    %651 = vmatpush1.xpose.msra.mxu0 0.0
    %652 = vmatprep.subr.mxu0 0.0
    %653 = vmatpush1.xpose.msra.mxu0 0.0
    %654 = vmatprep.subr.mxu0 0.0
    %655 = vmatpush1.xpose.msra.mxu0 0.0
    %656 = vmatprep.subr.mxu0 0.0
    %657 = vmatpush1.xpose.msra.mxu0 0.0
    %658 = vmatprep.subr.mxu0 0.0
    %659 = vmatpush1.xpose.msra.mxu0 0.0
    %660 = vmatprep.subr.mxu0 0.0
    %661 = vmatpush1.xpose.msra.mxu0 0.0
    %662 = vmatprep.subr.mxu0 0.0
    %663 = vmatpush1.xpose.msra.mxu0 0.0
    %664 = vmatprep.subr.mxu0 0.0
    %665 = vmatpush1.xpose.msra.mxu0 0.0
    %666 = vmatprep.mubr.f32.mxu0 0.0
    %667 = vmatmul.mubr.f32.gmra.mrb[0].mxu0 %v594
    %v668 = vpop.f32.mrb[0].mxu0
    %v669 = vadd.f32 %v180, %v668
    %v670 = vpop.f32.mrb[0].mxu0
    %671 = vmatprep.mubr.f32.mxu0 0.0
    %672 = vmatmul.mubr.f32.gmra.mrb[0].mxu0 %v596
    %v673 = vpop.f32.mrb[0].mxu0
    %v674 = vadd.f32 %v181, %v673
    %v675 = vpop.f32.mrb[0].mxu0
    %676 = vdwg.mxu0
    %v677 = vsel %vm272, %v669, -inf
    %678 = vmax.xlane.f32.xlu0 %v677
    %v679 = vpop.xlane.xlu0 %678
    %v680 = vsel %vm272, %v674, -inf
    %681 = vmax.xlane.f32.xlu0 %v680
    %v682 = vpop.xlane.xlu0 %681
    %v683 = vsub.f32 %v669, %v679
    %v684 = vsub.f32 %v674, %v682
    %v685 = vmul.f32 %v683, 1.442695
    %v686 = vpow.pop %v685
    %v687 = vmul.f32 %v684, 1.442695
    %v688 = vpow.pop %v687
    %v689 = vsel %vm272, %v686, 0.0
    %690 = vadd.xlane.f32.xlu0 %v689
    %v691 = vpop.xlane.xlu0 %690
    %v692 = vsel %vm272, %v688, 0.0
    %693 = vadd.xlane.f32.xlu0 %v692
    %v694 = vpop.xlane.xlu0 %693
    %v695 = vrcp.pop %v691
    %v696 = vrcp.pop %v694
    %v697 = vmul.f32 %v686, %v695
    %v698 = vmul.f32 %v688, %v696
    %v699 = vadd.f32 %v497, %v697
    %v700 = vadd.f32 %v498, %v698
    %701 = vrot.lane.b32.xlu0 %v172, 48
    %v702 = vpop.permute.xlu0 %701
    %703 = vrot.lane.b32.xlu0 %v177, 48
    %v704 = vpop.permute.xlu0 %703
    %v708 = vsel %vm272, %v697, 0
    %v711 = vsel %vm272, %v698, 0
    %713 = vmatprep.subr.mxu0 0.0
    %714 = vmatpush1.msra.mxu0 %v702
    %715 = vmatprep.subr.mxu0 0.0
    %716 = vmatpush1.msra.mxu0 %v704
    %717 = vmatprep.subr.mxu0 0.0
    %718 = vmatpush1.msra.mxu0 0.0
    %719 = vmatprep.subr.mxu0 0.0
    %720 = vmatpush1.msra.mxu0 0.0
    %721 = vmatprep.subr.mxu0 0.0
    %722 = vmatpush1.msra.mxu0 0.0
    %723 = vmatprep.subr.mxu0 0.0
    %724 = vmatpush1.msra.mxu0 0.0
    %725 = vmatprep.subr.mxu0 0.0
    %726 = vmatpush1.msra.mxu0 0.0
    %727 = vmatprep.subr.mxu0 0.0
    %728 = vmatpush1.msra.mxu0 0.0
    %729 = vmatprep.subr.mxu0 0.0
    %730 = vmatpush1.msra.mxu0 0.0
    %731 = vmatprep.subr.mxu0 0.0
    %732 = vmatpush1.msra.mxu0 0.0
    %733 = vmatprep.subr.mxu0 0.0
    %734 = vmatpush1.msra.mxu0 0.0
    %735 = vmatprep.subr.mxu0 0.0
    %736 = vmatpush1.msra.mxu0 0.0
    %737 = vmatprep.subr.mxu0 0.0
    %738 = vmatpush1.msra.mxu0 0.0
    %739 = vmatprep.subr.mxu0 0.0
    %740 = vmatpush1.msra.mxu0 0.0
    %741 = vmatprep.subr.mxu0 0.0
    %742 = vmatpush1.msra.mxu0 0.0
    %743 = vmatprep.subr.mxu0 0.0
    %744 = vmatpush1.msra.mxu0 0.0
    %745 = vmatprep.subr.mxu0 0.0
    %746 = vmatpush1.msra.mxu0 0.0
    %747 = vmatprep.subr.mxu0 0.0
    %748 = vmatpush1.msra.mxu0 0.0
    %749 = vmatprep.subr.mxu0 0.0
    %750 = vmatpush1.msra.mxu0 0.0
    %751 = vmatprep.subr.mxu0 0.0
    %752 = vmatpush1.msra.mxu0 0.0
    %753 = vmatprep.subr.mxu0 0.0
    %754 = vmatpush1.msra.mxu0 0.0
    %755 = vmatprep.subr.mxu0 0.0
    %756 = vmatpush1.msra.mxu0 0.0
    %757 = vmatprep.subr.mxu0 0.0
    %758 = vmatpush1.msra.mxu0 0.0
    %759 = vmatprep.subr.mxu0 0.0
    %760 = vmatpush1.msra.mxu0 0.0
    %761 = vmatprep.subr.mxu0 0.0
    %762 = vmatpush1.msra.mxu0 0.0
    %763 = vmatprep.subr.mxu0 0.0
    %764 = vmatpush1.msra.mxu0 0.0
    %765 = vmatprep.subr.mxu0 0.0
    %766 = vmatpush1.msra.mxu0 0.0
    %767 = vmatprep.subr.mxu0 0.0
    %768 = vmatpush1.msra.mxu0 0.0
    %769 = vmatprep.subr.mxu0 0.0
    %770 = vmatpush1.msra.mxu0 0.0
    %771 = vmatprep.subr.mxu0 0.0
    %772 = vmatpush1.msra.mxu0 0.0
    %773 = vmatprep.subr.mxu0 0.0
    %774 = vmatpush1.msra.mxu0 0.0
    %775 = vmatprep.subr.mxu0 0.0
    %776 = vmatpush1.msra.mxu0 0.0
    %777 = vmatprep.mubr.f32.mxu0 0.0
    %778 = vmatmul.mubr.f32.gmra.mrb[0].mxu0 %v708
    %v779 = vpop.f32.mrb[0].mxu0
    %v780 = vadd.f32 0.0, %v779
    %v781 = vpop.f32.mrb[0].mxu0
    %782 = vmatprep.mubr.f32.mxu0 0.0
    %783 = vmatmul.mubr.f32.gmra.mrb[0].mxu0 %v711
    %v784 = vpop.f32.mrb[0].mxu0
    %v785 = vadd.f32 0.0, %v784
    %v786 = vpop.f32.mrb[0].mxu0
    %787 = vdwg.mxu0
    %788 = vrot.lane.b32.xlu0 %v172, 104
    %v789 = vpop.permute.xlu0 %788
    %790 = vrot.lane.b32.xlu0 %v177, 104
    %v791 = vpop.permute.xlu0 %790
    %792 = vrot.lane.b32.xlu0 %v172, 72
    %v793 = vpop.permute.xlu0 %792
    %794 = vrot.lane.b32.xlu0 %v177, 72
    %v795 = vpop.permute.xlu0 %794
    %v796 = vsel %vm188, %v789, 0
    %v798 = vsel %vm188, %v791, 0
    %v800 = vsel %vm188, %v793, 0
    %v802 = vsel %vm188, %v795, 0
    %804 = vmatprep.subr.mxu0 0.0
    %805 = vmatpush1.xpose.msra.mxu0 %v800
    %806 = vmatprep.subr.mxu0 0.0
    %807 = vmatpush1.xpose.msra.mxu0 %v802
    %808 = vmatprep.subr.mxu0 0.0
    %809 = vmatpush1.xpose.msra.mxu0 0.0
    %810 = vmatprep.subr.mxu0 0.0
    %811 = vmatpush1.xpose.msra.mxu0 0.0
    %812 = vmatprep.subr.mxu0 0.0
    %813 = vmatpush1.xpose.msra.mxu0 0.0
    %814 = vmatprep.subr.mxu0 0.0
    %815 = vmatpush1.xpose.msra.mxu0 0.0
    %816 = vmatprep.subr.mxu0 0.0
    %817 = vmatpush1.xpose.msra.mxu0 0.0
    %818 = vmatprep.subr.mxu0 0.0
    %819 = vmatpush1.xpose.msra.mxu0 0.0
    %820 = vmatprep.subr.mxu0 0.0
    %821 = vmatpush1.xpose.msra.mxu0 0.0
    %822 = vmatprep.subr.mxu0 0.0
    %823 = vmatpush1.xpose.msra.mxu0 0.0
    %824 = vmatprep.subr.mxu0 0.0
    %825 = vmatpush1.xpose.msra.mxu0 0.0
    %826 = vmatprep.subr.mxu0 0.0
    %827 = vmatpush1.xpose.msra.mxu0 0.0
    %828 = vmatprep.subr.mxu0 0.0
    %829 = vmatpush1.xpose.msra.mxu0 0.0
    %830 = vmatprep.subr.mxu0 0.0
    %831 = vmatpush1.xpose.msra.mxu0 0.0
    %832 = vmatprep.subr.mxu0 0.0
    %833 = vmatpush1.xpose.msra.mxu0 0.0
    %834 = vmatprep.subr.mxu0 0.0
    %835 = vmatpush1.xpose.msra.mxu0 0.0
    %836 = vmatprep.subr.mxu0 0.0
    %837 = vmatpush1.xpose.msra.mxu0 0.0
    %838 = vmatprep.subr.mxu0 0.0
    %839 = vmatpush1.xpose.msra.mxu0 0.0
    %840 = vmatprep.subr.mxu0 0.0
    %841 = vmatpush1.xpose.msra.mxu0 0.0
    %842 = vmatprep.subr.mxu0 0.0
    %843 = vmatpush1.xpose.msra.mxu0 0.0
    %844 = vmatprep.subr.mxu0 0.0
    %845 = vmatpush1.xpose.msra.mxu0 0.0
    %846 = vmatprep.subr.mxu0 0.0
    %847 = vmatpush1.xpose.msra.mxu0 0.0
    %848 = vmatprep.subr.mxu0 0.0
    %849 = vmatpush1.xpose.msra.mxu0 0.0
    %850 = vmatprep.subr.mxu0 0.0
    %851 = vmatpush1.xpose.msra.mxu0 0.0
    %852 = vmatprep.subr.mxu0 0.0
    %853 = vmatpush1.xpose.msra.mxu0 0.0
    %854 = vmatprep.subr.mxu0 0.0
    %855 = vmatpush1.xpose.msra.mxu0 0.0
    %856 = vmatprep.subr.mxu0 0.0
    %857 = vmatpush1.xpose.msra.mxu0 0.0
    %858 = vmatprep.subr.mxu0 0.0
    %859 = vmatpush1.xpose.msra.mxu0 0.0
    %860 = vmatprep.subr.mxu0 0.0
    %861 = vmatpush1.xpose.msra.mxu0 0.0
    %862 = vmatprep.subr.mxu0 0.0
    %863 = vmatpush1.xpose.msra.mxu0 0.0
    %864 = vmatprep.subr.mxu0 0.0
    %865 = vmatpush1.xpose.msra.mxu0 0.0
    %866 = vmatprep.subr.mxu0 0.0
    %867 = vmatpush1.xpose.msra.mxu0 0.0
    %868 = vmatprep.mubr.f32.mxu0 0.0
    %869 = vmatmul.mubr.f32.gmra.mrb[0].mxu0 %v796
    %v870 = vpop.f32.mrb[0].mxu0
    %v871 = vadd.f32 %v180, %v870
    %v872 = vpop.f32.mrb[0].mxu0
    %873 = vmatprep.mubr.f32.mxu0 0.0
    %874 = vmatmul.mubr.f32.gmra.mrb[0].mxu0 %v798
    %v875 = vpop.f32.mrb[0].mxu0
    %v876 = vadd.f32 %v181, %v875
    %v877 = vpop.f32.mrb[0].mxu0
    %878 = vdwg.mxu0
    %v879 = vsel %vm272, %v871, -inf
    %880 = vmax.xlane.f32.xlu0 %v879
    %v881 = vpop.xlane.xlu0 %880
    %v882 = vsel %vm272, %v876, -inf
    %883 = vmax.xlane.f32.xlu0 %v882
    %v884 = vpop.xlane.xlu0 %883
    %v885 = vsub.f32 %v871, %v881
    %v886 = vsub.f32 %v876, %v884
    %v887 = vmul.f32 %v885, 1.442695
    %v888 = vpow.pop %v887
    %v889 = vmul.f32 %v886, 1.442695
    %v890 = vpow.pop %v889
    %v891 = vsel %vm272, %v888, 0.0
    %892 = vadd.xlane.f32.xlu0 %v891
    %v893 = vpop.xlane.xlu0 %892
    %v894 = vsel %vm272, %v890, 0.0
    %895 = vadd.xlane.f32.xlu0 %v894
    %v896 = vpop.xlane.xlu0 %895
    %v897 = vrcp.pop %v893
    %v898 = vrcp.pop %v896
    %v899 = vmul.f32 %v888, %v897
    %v900 = vmul.f32 %v890, %v898
    %v901 = vadd.f32 %v699, %v899
    %v902 = vadd.f32 %v700, %v900
    %903 = vrot.lane.b32.xlu0 %v172, 40
    %v904 = vpop.permute.xlu0 %903
    %905 = vrot.lane.b32.xlu0 %v177, 40
    %v906 = vpop.permute.xlu0 %905
    %v910 = vsel %vm272, %v899, 0
    %v913 = vsel %vm272, %v900, 0
    %915 = vmatprep.subr.mxu0 0.0
    %916 = vmatpush1.msra.mxu0 %v904
    %917 = vmatprep.subr.mxu0 0.0
    %918 = vmatpush1.msra.mxu0 %v906
    %919 = vmatprep.subr.mxu0 0.0
    %920 = vmatpush1.msra.mxu0 0.0
    %921 = vmatprep.subr.mxu0 0.0
    %922 = vmatpush1.msra.mxu0 0.0
    %923 = vmatprep.subr.mxu0 0.0
    %924 = vmatpush1.msra.mxu0 0.0
    %925 = vmatprep.subr.mxu0 0.0
    %926 = vmatpush1.msra.mxu0 0.0
    %927 = vmatprep.subr.mxu0 0.0
    %928 = vmatpush1.msra.mxu0 0.0
    %929 = vmatprep.subr.mxu0 0.0
    %930 = vmatpush1.msra.mxu0 0.0
    %931 = vmatprep.subr.mxu0 0.0
    %932 = vmatpush1.msra.mxu0 0.0
    %933 = vmatprep.subr.mxu0 0.0
    %934 = vmatpush1.msra.mxu0 0.0
    %935 = vmatprep.subr.mxu0 0.0
    %936 = vmatpush1.msra.mxu0 0.0
    %937 = vmatprep.subr.mxu0 0.0
    %938 = vmatpush1.msra.mxu0 0.0
    %939 = vmatprep.subr.mxu0 0.0
    %940 = vmatpush1.msra.mxu0 0.0
    %941 = vmatprep.subr.mxu0 0.0
    %942 = vmatpush1.msra.mxu0 0.0
    %943 = vmatprep.subr.mxu0 0.0
    %944 = vmatpush1.msra.mxu0 0.0
    %945 = vmatprep.subr.mxu0 0.0
    %946 = vmatpush1.msra.mxu0 0.0
    %947 = vmatprep.subr.mxu0 0.0
    %948 = vmatpush1.msra.mxu0 0.0
    %949 = vmatprep.subr.mxu0 0.0
    %950 = vmatpush1.msra.mxu0 0.0
    %951 = vmatprep.subr.mxu0 0.0
    %952 = vmatpush1.msra.mxu0 0.0
    %953 = vmatprep.subr.mxu0 0.0
    %954 = vmatpush1.msra.mxu0 0.0
    %955 = vmatprep.subr.mxu0 0.0
    %956 = vmatpush1.msra.mxu0 0.0
    %957 = vmatprep.subr.mxu0 0.0
    %958 = vmatpush1.msra.mxu0 0.0
    %959 = vmatprep.subr.mxu0 0.0
    %960 = vmatpush1.msra.mxu0 0.0
    %961 = vmatprep.subr.mxu0 0.0
    %962 = vmatpush1.msra.mxu0 0.0
    %963 = vmatprep.subr.mxu0 0.0
    %964 = vmatpush1.msra.mxu0 0.0
    %965 = vmatprep.subr.mxu0 0.0
    %966 = vmatpush1.msra.mxu0 0.0
    %967 = vmatprep.subr.mxu0 0.0
    %968 = vmatpush1.msra.mxu0 0.0
    %969 = vmatprep.subr.mxu0 0.0
    %970 = vmatpush1.msra.mxu0 0.0
    %971 = vmatprep.subr.mxu0 0.0
    %972 = vmatpush1.msra.mxu0 0.0
    %973 = vmatprep.subr.mxu0 0.0
    %974 = vmatpush1.msra.mxu0 0.0
    %975 = vmatprep.subr.mxu0 0.0
    %976 = vmatpush1.msra.mxu0 0.0
    %977 = vmatprep.subr.mxu0 0.0
    %978 = vmatpush1.msra.mxu0 0.0
    %979 = vmatprep.mubr.f32.mxu0 0.0
    %980 = vmatmul.mubr.f32.gmra.mrb[0].mxu0 %v910
    %v981 = vpop.f32.mrb[0].mxu0
    %v982 = vadd.f32 0.0, %v981
    %v983 = vpop.f32.mrb[0].mxu0
    %984 = vmatprep.mubr.f32.mxu0 0.0
    %985 = vmatmul.mubr.f32.gmra.mrb[0].mxu0 %v913
    %v986 = vpop.f32.mrb[0].mxu0
    %v987 = vadd.f32 0.0, %v986
    %v988 = vpop.f32.mrb[0].mxu0
    %989 = vdwg.mxu0
    %992 = vrot.lane.b32.xlu0 %v578, 8
    %v993 = vpop.permute.xlu0 %992
    %994 = vrot.lane.b32.xlu0 %v583, 8
    %v995 = vpop.permute.xlu0 %994
    %1000 = vrot.lane.b32.xlu0 %v780, 16
    %v1001 = vpop.permute.xlu0 %1000
    %1002 = vrot.lane.b32.xlu0 %v785, 16
    %v1003 = vpop.permute.xlu0 %1002
    %1008 = vrot.lane.b32.xlu0 %v982, 24
    %v1009 = vpop.permute.xlu0 %1008
    %1010 = vrot.lane.b32.xlu0 %v987, 24
    %v1011 = vpop.permute.xlu0 %1010
    %v1014 = vsel %vm188, %v376, %v993
    %v1015 = vsel %vm188, %v381, %v995
    %v1016 = vsel %vm272, %v1014, %v1001
    %v1017 = vsel %vm272, %v1015, %v1003
    %vm1018 = vcmask 195584
    %v1019 = vsel %vm1018, %v1016, %v1009
    %v1020 = vsel %vm1018, %v1017, %v1011
    %v1021 = vld [vmem:[#allocation7] sm:$0xff]
    %v1022 = vld [vmem:[#allocation7 + $0x8] sm:$0xff]
    %v1023 = vld [vmem:[#allocation7 + $0x10] sm:$0xff]
    %v1024 = vld [vmem:[#allocation7 + $0x18] sm:$0xff]
    %v1025 = vld [vmem:[%s4] sm:$0x1]
    %v1027 = vlaneseq
    %v1028 = vshrl.u32 %v1027, 7
    %v1029 = vsub.s32 0, %v1028
    %v1030 = vrot.slane %v1025, %v1029
    %v1033 = vsel %vm98, %v1019, 0
    %v1036 = vsel %vm98, %v1020, 0
    %1038 = vmatprep.subr.mxu0 0.0
    %1039 = vmatpush1.msra.mxu0 %v1021
    %1040 = vmatprep.subr.mxu0 0.0
    %1041 = vmatpush1.msra.mxu0 %v1022
    %1042 = vmatprep.subr.mxu0 0.0
    %1043 = vmatpush1.msra.mxu0 %v1023
    %1044 = vmatprep.subr.mxu0 0.0
    %1045 = vmatpush1.msra.mxu0 %v1024
    %1046 = vmatprep.subr.mxu0 0.0
    %1047 = vmatpush1.msra.mxu0 0.0
    %1048 = vmatprep.subr.mxu0 0.0
    %1049 = vmatpush1.msra.mxu0 0.0
    %1050 = vmatprep.subr.mxu0 0.0
    %1051 = vmatpush1.msra.mxu0 0.0
    %1052 = vmatprep.subr.mxu0 0.0
    %1053 = vmatpush1.msra.mxu0 0.0
    %1054 = vmatprep.subr.mxu0 0.0
    %1055 = vmatpush1.msra.mxu0 0.0
    %1056 = vmatprep.subr.mxu0 0.0
    %1057 = vmatpush1.msra.mxu0 0.0
    %1058 = vmatprep.subr.mxu0 0.0
    %1059 = vmatpush1.msra.mxu0 0.0
    %1060 = vmatprep.subr.mxu0 0.0
    %1061 = vmatpush1.msra.mxu0 0.0
    %1062 = vmatprep.subr.mxu0 0.0
    %1063 = vmatpush1.msra.mxu0 0.0
    %1064 = vmatprep.subr.mxu0 0.0
    %1065 = vmatpush1.msra.mxu0 0.0
    %1066 = vmatprep.subr.mxu0 0.0
    %1067 = vmatpush1.msra.mxu0 0.0
    %1068 = vmatprep.subr.mxu0 0.0
    %1069 = vmatpush1.msra.mxu0 0.0
    %1070 = vmatprep.subr.mxu0 0.0
    %1071 = vmatpush1.msra.mxu0 0.0
    %1072 = vmatprep.subr.mxu0 0.0
    %1073 = vmatpush1.msra.mxu0 0.0
    %1074 = vmatprep.subr.mxu0 0.0
    %1075 = vmatpush1.msra.mxu0 0.0
    %1076 = vmatprep.subr.mxu0 0.0
    %1077 = vmatpush1.msra.mxu0 0.0
    %1078 = vmatprep.subr.mxu0 0.0
    %1079 = vmatpush1.msra.mxu0 0.0
    %1080 = vmatprep.subr.mxu0 0.0
    %1081 = vmatpush1.msra.mxu0 0.0
    %1082 = vmatprep.subr.mxu0 0.0
    %1083 = vmatpush1.msra.mxu0 0.0
    %1084 = vmatprep.subr.mxu0 0.0
    %1085 = vmatpush1.msra.mxu0 0.0
    %1086 = vmatprep.subr.mxu0 0.0
    %1087 = vmatpush1.msra.mxu0 0.0
    %1088 = vmatprep.subr.mxu0 0.0
    %1089 = vmatpush1.msra.mxu0 0.0
    %1090 = vmatprep.subr.mxu0 0.0
    %1091 = vmatpush1.msra.mxu0 0.0
    %1092 = vmatprep.subr.mxu0 0.0
    %1093 = vmatpush1.msra.mxu0 0.0
    %1094 = vmatprep.subr.mxu0 0.0
    %1095 = vmatpush1.msra.mxu0 0.0
    %1096 = vmatprep.subr.mxu0 0.0
    %1097 = vmatpush1.msra.mxu0 0.0
    %1098 = vmatprep.subr.mxu0 0.0
    %1099 = vmatpush1.msra.mxu0 0.0
    %1100 = vmatprep.subr.mxu0 0.0
    %1101 = vmatpush1.msra.mxu0 0.0
    %1102 = vmatprep.mubr.f32.mxu0 0.0
    %1103 = vmatmul.mubr.f32.gmra.mrb[0].mxu0 %v1033
    %v1104 = vpop.f32.mrb[0].mxu0
    %v1105 = vadd.f32 %v1030, %v1104
    %v1106 = vpop.f32.mrb[0].mxu0
    %1107 = vmatprep.mubr.f32.mxu0 0.0
    %1108 = vmatmul.mubr.f32.gmra.mrb[0].mxu0 %v1036
    %v1109 = vpop.f32.mrb[0].mxu0
    %v1110 = vadd.f32 %v1030, %v1109
    %v1111 = vpop.f32.mrb[0].mxu0
    %1112 = vdwg.mxu0
    %1113 = vst.msk [vmem:[#allocation10] sm:$0xff] %vm98, %v1105
    %1114 = vst.msk [vmem:[#allocation10 + $0x8] sm:$0xff] %vm98, %v1110
    %v1115 = vmul.f32 %v901, 0.25
    %v1116 = vmul.f32 %v902, 0.25
    %v1117 = vld [vmem:[%s6] sm:$0xff]
    %v1118 = vld [vmem:[%s6 + $0x8] sm:$0xff]
    %v1120 = vsel %vm272, %v1117, 0
    %v1123 = vsel %vm272, %v1118, 0
    %1125 = vmatprep.subr.mxu0 0.0
    %1126 = vmatpush1.msra.mxu0 %v1115
    %1127 = vmatprep.subr.mxu0 0.0
    %1128 = vmatpush1.msra.mxu0 %v1116
    %1129 = vmatprep.subr.mxu0 0.0
    %1130 = vmatpush1.msra.mxu0 0.0
    %1131 = vmatprep.subr.mxu0 0.0
    %1132 = vmatpush1.msra.mxu0 0.0
    %1133 = vmatprep.subr.mxu0 0.0
    %1134 = vmatpush1.msra.mxu0 0.0
    %1135 = vmatprep.subr.mxu0 0.0
    %1136 = vmatpush1.msra.mxu0 0.0
    %1137 = vmatprep.subr.mxu0 0.0
    %1138 = vmatpush1.msra.mxu0 0.0
    %1139 = vmatprep.subr.mxu0 0.0
    %1140 = vmatpush1.msra.mxu0 0.0
    %1141 = vmatprep.subr.mxu0 0.0
    %1142 = vmatpush1.msra.mxu0 0.0
    %1143 = vmatprep.subr.mxu0 0.0
    %1144 = vmatpush1.msra.mxu0 0.0
    %1145 = vmatprep.subr.mxu0 0.0
    %1146 = vmatpush1.msra.mxu0 0.0
    %1147 = vmatprep.subr.mxu0 0.0
    %1148 = vmatpush1.msra.mxu0 0.0
    %1149 = vmatprep.subr.mxu0 0.0
    %1150 = vmatpush1.msra.mxu0 0.0
    %1151 = vmatprep.subr.mxu0 0.0
    %1152 = vmatpush1.msra.mxu0 0.0
    %1153 = vmatprep.subr.mxu0 0.0
    %1154 = vmatpush1.msra.mxu0 0.0
    %1155 = vmatprep.subr.mxu0 0.0
    %1156 = vmatpush1.msra.mxu0 0.0
    %1157 = vmatprep.subr.mxu0 0.0
    %1158 = vmatpush1.msra.mxu0 0.0
    %1159 = vmatprep.subr.mxu0 0.0
    %1160 = vmatpush1.msra.mxu0 0.0
    %1161 = vmatprep.subr.mxu0 0.0
    %1162 = vmatpush1.msra.mxu0 0.0
    %1163 = vmatprep.subr.mxu0 0.0
    %1164 = vmatpush1.msra.mxu0 0.0
    %1165 = vmatprep.subr.mxu0 0.0
    %1166 = vmatpush1.msra.mxu0 0.0
    %1167 = vmatprep.subr.mxu0 0.0
    %1168 = vmatpush1.msra.mxu0 0.0
    %1169 = vmatprep.subr.mxu0 0.0
    %1170 = vmatpush1.msra.mxu0 0.0
    %1171 = vmatprep.subr.mxu0 0.0
    %1172 = vmatpush1.msra.mxu0 0.0
    %1173 = vmatprep.subr.mxu0 0.0
    %1174 = vmatpush1.msra.mxu0 0.0
    %1175 = vmatprep.subr.mxu0 0.0
    %1176 = vmatpush1.msra.mxu0 0.0
    %1177 = vmatprep.subr.mxu0 0.0
    %1178 = vmatpush1.msra.mxu0 0.0
    %1179 = vmatprep.subr.mxu0 0.0
    %1180 = vmatpush1.msra.mxu0 0.0
    %1181 = vmatprep.subr.mxu0 0.0
    %1182 = vmatpush1.msra.mxu0 0.0
    %1183 = vmatprep.subr.mxu0 0.0
    %1184 = vmatpush1.msra.mxu0 0.0
    %1185 = vmatprep.subr.mxu0 0.0
    %1186 = vmatpush1.msra.mxu0 0.0
    %1187 = vmatprep.subr.mxu0 0.0
    %1188 = vmatpush1.msra.mxu0 0.0
    %1189 = vmatprep.mubr.f32.mxu0 0.0
    %1190 = vmatmul.mubr.f32.gmra.mrb[0].mxu0 %v1120
    %v1191 = vpop.f32.mrb[0].mxu0
    %v1192 = vadd.f32 0.0, %v1191
    %v1193 = vpop.f32.mrb[0].mxu0
    %1194 = vmatprep.mubr.f32.mxu0 0.0
    %1195 = vmatmul.mubr.f32.gmra.mrb[0].mxu0 %v1123
    %v1196 = vpop.f32.mrb[0].mxu0
    %v1197 = vadd.f32 0.0, %v1196
    %v1198 = vpop.f32.mrb[0].mxu0
    %1199 = vdwg.mxu0
    %v1201 = vsel %vm272, %v1192, 0
    %1203 = vmatprep.subr.mxu0 0.0
    %1204 = vmatpush1.xpose.msra.mxu0 %v1120
    %1205 = vmatprep.subr.mxu0 0.0
    %1206 = vmatpush1.xpose.msra.mxu0 0.0
    %1207 = vmatprep.subr.mxu0 0.0
    %1208 = vmatpush1.xpose.msra.mxu0 0.0
    %1209 = vmatprep.subr.mxu0 0.0
    %1210 = vmatpush1.xpose.msra.mxu0 0.0
    %1211 = vmatprep.subr.mxu0 0.0
    %1212 = vmatpush1.xpose.msra.mxu0 0.0
    %1213 = vmatprep.subr.mxu0 0.0
    %1214 = vmatpush1.xpose.msra.mxu0 0.0
    %1215 = vmatprep.subr.mxu0 0.0
    %1216 = vmatpush1.xpose.msra.mxu0 0.0
    %1217 = vmatprep.subr.mxu0 0.0
    %1218 = vmatpush1.xpose.msra.mxu0 0.0
    %1219 = vmatprep.subr.mxu0 0.0
    %1220 = vmatpush1.xpose.msra.mxu0 0.0
    %1221 = vmatprep.subr.mxu0 0.0
    %1222 = vmatpush1.xpose.msra.mxu0 0.0
    %1223 = vmatprep.subr.mxu0 0.0
    %1224 = vmatpush1.xpose.msra.mxu0 0.0
    %1225 = vmatprep.subr.mxu0 0.0
    %1226 = vmatpush1.xpose.msra.mxu0 0.0
    %1227 = vmatprep.subr.mxu0 0.0
    %1228 = vmatpush1.xpose.msra.mxu0 0.0
    %1229 = vmatprep.subr.mxu0 0.0
    %1230 = vmatpush1.xpose.msra.mxu0 0.0
    %1231 = vmatprep.subr.mxu0 0.0
    %1232 = vmatpush1.xpose.msra.mxu0 0.0
    %1233 = vmatprep.subr.mxu0 0.0
    %1234 = vmatpush1.xpose.msra.mxu0 0.0
    %1235 = vmatprep.subr.mxu0 0.0
    %1236 = vmatpush1.xpose.msra.mxu0 0.0
    %1237 = vmatprep.subr.mxu0 0.0
    %1238 = vmatpush1.xpose.msra.mxu0 0.0
    %1239 = vmatprep.subr.mxu0 0.0
    %1240 = vmatpush1.xpose.msra.mxu0 0.0
    %1241 = vmatprep.subr.mxu0 0.0
    %1242 = vmatpush1.xpose.msra.mxu0 0.0
    %1243 = vmatprep.subr.mxu0 0.0
    %1244 = vmatpush1.xpose.msra.mxu0 0.0
    %1245 = vmatprep.subr.mxu0 0.0
    %1246 = vmatpush1.xpose.msra.mxu0 0.0
    %1247 = vmatprep.subr.mxu0 0.0
    %1248 = vmatpush1.xpose.msra.mxu0 0.0
    %1249 = vmatprep.subr.mxu0 0.0
    %1250 = vmatpush1.xpose.msra.mxu0 0.0
    %1251 = vmatprep.subr.mxu0 0.0
    %1252 = vmatpush1.xpose.msra.mxu0 0.0
    %1253 = vmatprep.subr.mxu0 0.0
    %1254 = vmatpush1.xpose.msra.mxu0 0.0
    %1255 = vmatprep.subr.mxu0 0.0
    %1256 = vmatpush1.xpose.msra.mxu0 0.0
    %1257 = vmatprep.subr.mxu0 0.0
    %1258 = vmatpush1.xpose.msra.mxu0 0.0
    %1259 = vmatprep.subr.mxu0 0.0
    %1260 = vmatpush1.xpose.msra.mxu0 0.0
    %1261 = vmatprep.subr.mxu0 0.0
    %1262 = vmatpush1.xpose.msra.mxu0 0.0
    %1263 = vmatprep.subr.mxu0 0.0
    %1264 = vmatpush1.xpose.msra.mxu0 0.0
    %1265 = vmatprep.subr.mxu0 0.0
    %1266 = vmatpush1.xpose.msra.mxu0 0.0
    %1267 = vmatprep.mubr.f32.mxu0 0.0
    %1268 = vmatmul.mubr.f32.gmra.mrb[0].mxu0 %v1201
    %v1269 = vpop.f32.mrb[0].mxu0
    %v1270 = vadd.f32 0.0, %v1269
    %v1271 = vpop.f32.mrb[0].mxu0
    %1272 = vdwg.mxu0
    %v1274 = vsel %vm272, %v1197, 0
    %1276 = vmatprep.subr.mxu0 0.0
    %1277 = vmatpush1.xpose.msra.mxu0 %v1123
    %1278 = vmatprep.subr.mxu0 0.0
    %1279 = vmatpush1.xpose.msra.mxu0 0.0
    %1280 = vmatprep.subr.mxu0 0.0
    %1281 = vmatpush1.xpose.msra.mxu0 0.0
    %1282 = vmatprep.subr.mxu0 0.0
    %1283 = vmatpush1.xpose.msra.mxu0 0.0
    %1284 = vmatprep.subr.mxu0 0.0
    %1285 = vmatpush1.xpose.msra.mxu0 0.0
    %1286 = vmatprep.subr.mxu0 0.0
    %1287 = vmatpush1.xpose.msra.mxu0 0.0
    %1288 = vmatprep.subr.mxu0 0.0
    %1289 = vmatpush1.xpose.msra.mxu0 0.0
    %1290 = vmatprep.subr.mxu0 0.0
    %1291 = vmatpush1.xpose.msra.mxu0 0.0
    %1292 = vmatprep.subr.mxu0 0.0
    %1293 = vmatpush1.xpose.msra.mxu0 0.0
    %1294 = vmatprep.subr.mxu0 0.0
    %1295 = vmatpush1.xpose.msra.mxu0 0.0
    %1296 = vmatprep.subr.mxu0 0.0
    %1297 = vmatpush1.xpose.msra.mxu0 0.0
    %1298 = vmatprep.subr.mxu0 0.0
    %1299 = vmatpush1.xpose.msra.mxu0 0.0
    %1300 = vmatprep.subr.mxu0 0.0
    %1301 = vmatpush1.xpose.msra.mxu0 0.0
    %1302 = vmatprep.subr.mxu0 0.0
    %1303 = vmatpush1.xpose.msra.mxu0 0.0
    %1304 = vmatprep.subr.mxu0 0.0
    %1305 = vmatpush1.xpose.msra.mxu0 0.0
    %1306 = vmatprep.subr.mxu0 0.0
    %1307 = vmatpush1.xpose.msra.mxu0 0.0
    %1308 = vmatprep.subr.mxu0 0.0
    %1309 = vmatpush1.xpose.msra.mxu0 0.0
    %1310 = vmatprep.subr.mxu0 0.0
    %1311 = vmatpush1.xpose.msra.mxu0 0.0
    %1312 = vmatprep.subr.mxu0 0.0
    %1313 = vmatpush1.xpose.msra.mxu0 0.0
    %1314 = vmatprep.subr.mxu0 0.0
    %1315 = vmatpush1.xpose.msra.mxu0 0.0
    %1316 = vmatprep.subr.mxu0 0.0
    %1317 = vmatpush1.xpose.msra.mxu0 0.0
    %1318 = vmatprep.subr.mxu0 0.0
    %1319 = vmatpush1.xpose.msra.mxu0 0.0
    %1320 = vmatprep.subr.mxu0 0.0
    %1321 = vmatpush1.xpose.msra.mxu0 0.0
    %1322 = vmatprep.subr.mxu0 0.0
    %1323 = vmatpush1.xpose.msra.mxu0 0.0
    %1324 = vmatprep.subr.mxu0 0.0
    %1325 = vmatpush1.xpose.msra.mxu0 0.0
    %1326 = vmatprep.subr.mxu0 0.0
    %1327 = vmatpush1.xpose.msra.mxu0 0.0
    %1328 = vmatprep.subr.mxu0 0.0
    %1329 = vmatpush1.xpose.msra.mxu0 0.0
    %1330 = vmatprep.subr.mxu0 0.0
    %1331 = vmatpush1.xpose.msra.mxu0 0.0
    %1332 = vmatprep.subr.mxu0 0.0
    %1333 = vmatpush1.xpose.msra.mxu0 0.0
    %1334 = vmatprep.subr.mxu0 0.0
    %1335 = vmatpush1.xpose.msra.mxu0 0.0
    %1336 = vmatprep.subr.mxu0 0.0
    %1337 = vmatpush1.xpose.msra.mxu0 0.0
    %1338 = vmatprep.subr.mxu0 0.0
    %1339 = vmatpush1.xpose.msra.mxu0 0.0
    %1340 = vmatprep.mubr.f32.mxu0 0.0
    %1341 = vmatmul.mubr.f32.gmra.mrb[0].mxu0 %v1274
    %v1342 = vpop.f32.mrb[0].mxu0
    %v1343 = vadd.f32 0.0, %v1342
    %v1344 = vpop.f32.mrb[0].mxu0
    %1345 = vdwg.mxu0
    %1346 = vst.msk [vmem:[#allocation11] sm:$0xff] %vm188, %v1270
    %1347 = vst.msk [vmem:[#allocation11 + $0x8] sm:$0xff] %vm188, %v1343
    // Predicated region
    $region46: #{multihead_self_attention.1} parent=1 // pred_check
      _
    $region47: #{multihead_self_attention.1} parent=1 // pred_check_branch
      %1349 = sbr.rel (0) target = $region49
    $region48: #{multihead_self_attention.1} parent=1 // pred_region
      %s1351 = ssub.s32 256, 256
      %1352 = vsyncadd [#allocation4], %s1351
      %s1353 = sshll.u32 [#allocation10], 4
      %s1354 = int_to_ptr.vmem [resolvable:$true] %s1353
      %1359 = dma.vmem_to_hbm [thread:$0]  %s1354, 256, %s7, [#allocation4], 128, 128, 8
    $region49: #{multihead_self_attention.1} parent=1 // pred_fallthru
      _
    // Predicated region
    $region50: #{multihead_self_attention.1} parent=1 // pred_check
      _
    $region51: #{multihead_self_attention.1} parent=1 // pred_check_branch
      %1361 = sbr.rel (0) target = $region53
    $region52: #{multihead_self_attention.1} parent=1 // pred_region
      %s1363 = ssub.s32 256, 256
      %1364 = vsyncadd [#allocation12], %s1363
      %s1365 = sshll.u32 [#allocation11], 4
      %s1366 = int_to_ptr.vmem [resolvable:$true] %s1365
      %1371 = dma.vmem_to_hbm [thread:$0]  %s1366, 256, %s8, [#allocation12], 128, 128, 8
    $region53: #{multihead_self_attention.1} parent=1 // pred_fallthru
      _
    // Predicated region
    $region54: #{multihead_self_attention.1} parent=1 // pred_check
      _
    $region55: #{multihead_self_attention.1} parent=1 // pred_check_branch
      %1373 = sbr.rel (0) target = $region57
    $region56: #{multihead_self_attention.1} parent=1 // pred_region
      %1374 = dma.done [#allocation4], 256
    $region57: #{multihead_self_attention.1} parent=1 // pred_fallthru
      _
    // Predicated region
    $region58: #{multihead_self_attention.1} parent=1 // pred_check
      _
    $region59: #{multihead_self_attention.1} parent=1 // pred_check_branch
      %1376 = sbr.rel (0) target = $region61
    $region60: #{multihead_self_attention.1} parent=1 // pred_region
      %1377 = dma.done [#allocation12], 256
    $region61: #{multihead_self_attention.1} parent=1 // pred_fallthru
      _
    %1378 = vsyncpa [#allocation3], 1
    %1379 = vsyncpa [#allocation6], 1
    %1380 = vsyncpa [#allocation9], 1
    %1381 = vsyncpa [#allocation4], 1
    %1382 = vsyncpa [#allocation12], 1

</llo_original>
